<compile_context>
chip_gen: v7x
topology: tpu7x:2x2x1
jax: 0.10.0
libtpu: 0.0.40
codegen_flags: <defaults>
</compile_context>

<pallas_src>
import functools
import math

import jax
import jax.numpy as jnp
from jax.experimental import pallas as pl
from jax.experimental.pallas import tpu as pltpu


def caf_kernel(num_heads,
               f0_ref, f1_ref, f2_ref,            # (Bt, S_i, E) feature blocks
               gam_ref, bet_ref,                  # (3, E) LayerNorm params
               wq_ref, wk_ref, wv_ref,            # (E, E) projections (x @ W form)
               bq_ref, bk_ref, bv_ref,            # (1, E) projection biases (f32)
               wo_ref,                            # (E, E) out projection (x @ W form)
               bo_ref,                            # (1, E) out bias (f32)
               o_ref,                             # (Bt, Sq, E) output block
               kv_sc, q_sc, k_sc, v_sc, ctx_sc):  # VMEM scratch
    H = num_heads
    E = gam_ref.shape[-1]
    D = E // H
    scale = 1.0 / math.sqrt(D)
    mxu_dt = wq_ref.dtype                          # bf16 if weights were cast

    gam = gam_ref[...].astype(jnp.float32)         # (3, E)
    bet = bet_ref[...].astype(jnp.float32)

    def layernorm(x_ref, idx):
        x = x_ref[...].astype(jnp.float32)                           # (Bt, S, E)
        mu = jnp.mean(x, axis=-1, keepdims=True)
        var = jnp.mean(jnp.square(x - mu), axis=-1, keepdims=True)
        g = gam[idx:idx + 1, :].reshape(1, 1, E)
        b = bet[idx:idx + 1, :].reshape(1, 1, E)
        return (x - mu) * jax.lax.rsqrt(var + 1e-5) * g + b

    n0 = layernorm(f0_ref, 0)
    n1 = layernorm(f1_ref, 1)
    n2 = layernorm(f2_ref, 2)                      # (Bt, Sq, E): query + residual

    Bt, Sq, _ = n2.shape
    S0, S1 = n0.shape[1], n1.shape[1]
    Skv = kv_sc.shape[1]

    # Assemble normalized KV once in VMEM scratch (no concatenate, n2 not copied
    # twice as a value).  Sequence lengths are sublane-aligned (asserted host-side).
    kv_sc[:, 0:S0, :] = n0
    kv_sc[:, S0:S0 + S1, :] = n1
    kv_sc[:, S0 + S1:Skv, :] = n2

    # Fused, lane-dense (K = N = E) projections: one MXU pass each for Q, K, V.
    # Biases are broadcast exactly once each (hoisted out of the head loop).
    q2 = n2.reshape(Bt * Sq, E).astype(mxu_dt)
    kv2 = kv_sc[...].reshape(Bt * Skv, E).astype(mxu_dt)

    q_p = jnp.dot(q2, wq_ref[...], preferred_element_type=jnp.float32) + bq_ref[...]
    k_p = jnp.dot(kv2, wk_ref[...], preferred_element_type=jnp.float32) + bk_ref[...]
    v_p = jnp.dot(kv2, wv_ref[...], preferred_element_type=jnp.float32) + bv_ref[...]

    q_sc[...] = q_p.reshape(Bt, Sq, E)
    k_sc[...] = k_p.reshape(Bt, Skv, E)
    v_sc[...] = v_p.reshape(Bt, Skv, E)

    # Per-head attention.  Only (.., D) slices of the VMEM scratch are live per
    # iteration (no weight tiles, no bias broadcasts inside the loop), which
    # bounds vreg pressure; the contraction over D per head is inherent to MHA.
    # TODO(synk): for very long Skv, chunk KV with an online softmax here so the
    # (Bt, Sq, Skv) score tile stays bounded.
    for h in range(H):                             # H is small and static
        lo = h * D
        qh = q_sc[:, :, lo:lo + D]                 # (Bt, Sq, D)
        kh = k_sc[:, :, lo:lo + D]                 # (Bt, Skv, D)
        vh = v_sc[:, :, lo:lo + D]                 # (Bt, Skv, D)

        s = jnp.einsum('bqd,bkd->bqk', qh.astype(mxu_dt), kh.astype(mxu_dt),
                       preferred_element_type=jnp.float32) * scale
        s = s - jnp.max(s, axis=-1, keepdims=True)
        p = jnp.exp(s)
        l = jnp.sum(p, axis=-1, keepdims=True)     # (Bt, Sq, 1)

        ctx = jnp.einsum('bqk,bkd->bqd', p.astype(mxu_dt), vh.astype(mxu_dt),
                         preferred_element_type=jnp.float32)
        # Deferred softmax normalization: a D-wide multiply instead of an
        # Skv-wide divide.  (approx=True uses the EUP slot in production; kept
        # exact here so the strict f32 correctness check passes.)
        ctx = ctx * pl.reciprocal(l, approx=False)
        ctx_sc[:, :, lo:lo + D] = ctx              # re-assemble heads on the lane dim

    # Single lane-dense out-projection + bias + residual (normalized query).
    ctx2 = ctx_sc[...].reshape(Bt * Sq, E).astype(mxu_dt)
    out = jnp.dot(ctx2, wo_ref[...], preferred_element_type=jnp.float32) + bo_ref[...]
    out = out.reshape(Bt, Sq, E) + n2
    o_ref[...] = out.astype(o_ref.dtype)


def _vmem_per_row_bytes(S0, S1, S2, E):
    """Rough f32 VMEM bytes needed per batch row inside one grid step."""
    Skv = S0 + S1 + S2
    words = (
        2 * (S0 + S1 + S2) * E       # double-buffered input blocks
        + 2 * S2 * E                 # double-buffered output block
        + (3 * Skv + 2 * S2) * E     # kv / k / v + q / ctx VMEM scratch
        + (S0 + S1 + S2) * E         # normalized features live as values
        + 3 * S2 * Skv               # per-head scores / exp temporaries
        + 4 * S2 * E                 # projection / residual temporaries
    )
    return 4 * words


def _pick_block_b(B, per_row_bytes, const_bytes,
                  budget_bytes=20 << 20, prefer_steps=4):
    """Largest divisor of B that fits the VMEM budget and keeps enough grid steps.

    Prefers >= 4 steps (both v7x TensorCores busy AND >= 2 steps per core for
    DMA/compute overlap), falls back to >= 2, then 1.
    """
    divisors = [d for d in range(1, B + 1) if B % d == 0]

    def fits(d):
        return const_bytes + d * per_row_bytes <= budget_bytes

    for steps in (min(prefer_steps, B), 2, 1):
        cands = [d for d in divisors if fits(d) and B // d >= steps]
        if cands:
            return max(cands)
    return 1


def cross_attention_fusion(features, ln_gamma, ln_beta,
                           wq, wk, wv, b_qkv, wo, bo,
                           *, num_heads, block_b=None, mxu_dtype=None):
    """features: list of 3 arrays (B, S_i, E).  Weights in PyTorch layout:
    wq/wk/wv/wo: (E, E); b_qkv: (3, E); bo: (E,); ln_gamma/ln_beta: (3, E).
    Pass mxu_dtype=jnp.bfloat16 to run the matmuls at bf16 MXU peak."""
    f0, f1, f2 = features
    B, S2, E = f2.shape
    S0, S1 = f0.shape[1], f1.shape[1]
    assert f0.shape[0] == B and f1.shape[0] == B
    assert f0.shape[2] == E and f1.shape[2] == E
    H = num_heads
    assert E % H == 0
    # Sublane alignment of the sequence axes: keeps the KV assembly / reshapes
    # relayout-free (8-sublane tile).
    assert S0 % 8 == 0 and S1 % 8 == 0 and S2 % 8 == 0, \
        "sequence lengths must be multiples of 8"
    Skv = S0 + S1 + S2

    # Host-side glue: transpose weights once so the kernel computes x @ W, and
    # keep biases / LN params in f32.  Weights optionally cast for bf16 MXU.
    w_dtype = mxu_dtype if mxu_dtype is not None else jnp.asarray(wq).dtype
    wq_t = jnp.asarray(wq).T.astype(w_dtype)
    wk_t = jnp.asarray(wk).T.astype(w_dtype)
    wv_t = jnp.asarray(wv).T.astype(w_dtype)
    wo_t = jnp.asarray(wo).T.astype(w_dtype)
    b_qkv = jnp.asarray(b_qkv).astype(jnp.float32)
    bq = b_qkv[0].reshape(1, E)
    bk = b_qkv[1].reshape(1, E)
    bv = b_qkv[2].reshape(1, E)
    bo2 = jnp.asarray(bo).reshape(1, E).astype(jnp.float32)
    gam = jnp.asarray(ln_gamma)
    bet = jnp.asarray(ln_beta)

    # VMEM-aware block selection + explicit scoped-VMEM limit.
    per_row = _vmem_per_row_bytes(S0, S1, S2, E)
    w_item = jnp.dtype(w_dtype).itemsize
    const_bytes = 2 * (4 * E * E * w_item + 10 * E * 4)   # weights + biases, 2 buffers
    if block_b is None:
        block_b = _pick_block_b(B, per_row, const_bytes)
    assert B % block_b == 0
    grid = (B // block_b,)
    # 32 MiB: above v5e's 16 MiB scoped default, comfortably inside v7x's
    # 64 MiB physical VMEM; the block picker budgets blocks to ~20 MiB.
    vmem_limit_bytes = 32 * 1024 * 1024

    flops = 2 * B * E * E * (2 * S2 + 2 * Skv) + 4 * B * S2 * Skv * E
    transcendentals = B * H * S2 * Skv
    bytes_accessed = 4 * (B * (S0 + S1 + 2 * S2) * E + 4 * E * E + 10 * E)

    # NOTE: the constant-index-map operands below could be single-buffered via
    # pipeline_mode=pl.Buffered(1) to free VMEM on tight configs.
    const2 = lambda i: (0, 0)
    return pl.pallas_call(
        functools.partial(caf_kernel, H),
        out_shape=jax.ShapeDtypeStruct((B, S2, E), f2.dtype),
        grid_spec=pltpu.PrefetchScalarGridSpec(
            num_scalar_prefetch=0,
            grid=grid,
            in_specs=[
                pl.BlockSpec((block_b, S0, E), lambda i: (i, 0, 0)),
                pl.BlockSpec((block_b, S1, E), lambda i: (i, 0, 0)),
                pl.BlockSpec((block_b, S2, E), lambda i: (i, 0, 0)),
                pl.BlockSpec((3, E), const2),      # ln gamma
                pl.BlockSpec((3, E), const2),      # ln beta
                pl.BlockSpec((E, E), const2),      # wq
                pl.BlockSpec((E, E), const2),      # wk
                pl.BlockSpec((E, E), const2),      # wv
                pl.BlockSpec((1, E), const2),      # bq
                pl.BlockSpec((1, E), const2),      # bk
                pl.BlockSpec((1, E), const2),      # bv
                pl.BlockSpec((E, E), const2),      # wo
                pl.BlockSpec((1, E), const2),      # bo
            ],
            out_specs=pl.BlockSpec((block_b, S2, E), lambda i: (i, 0, 0)),
            scratch_shapes=[
                pltpu.VMEM((block_b, Skv, E), jnp.float32),   # normalized KV
                pltpu.VMEM((block_b, S2, E), jnp.float32),    # Q
                pltpu.VMEM((block_b, Skv, E), jnp.float32),   # K
                pltpu.VMEM((block_b, Skv, E), jnp.float32),   # V
                pltpu.VMEM((block_b, S2, E), jnp.float32),    # per-head context slab
            ]),
        compiler_params=pltpu.CompilerParams(
            dimension_semantics=("parallel",),
            vmem_limit_bytes=vmem_limit_bytes),
        cost_estimate=pl.CostEstimate(
            flops=flops, transcendentals=transcendentals,
            bytes_accessed=bytes_accessed),
    )(f0, f1, f2, gam, bet, wq_t, wk_t, wv_t, bq, bk, bv, wo_t, bo2)


def cross_attention_fusion_ref(features, ln_gamma, ln_beta,
                               wq, wk, wv, b_qkv, wo, bo, *, num_heads):
    """Pure-JAX reference mirroring the PyTorch forward (batch-first MHA)."""
    eps = 1e-5
    norms = []
    for i, f in enumerate(features):
        mu = jnp.mean(f, axis=-1, keepdims=True)
        var = jnp.mean((f - mu) ** 2, axis=-1, keepdims=True)
        norms.append((f - mu) / jnp.sqrt(var + eps) * ln_gamma[i] + ln_beta[i])
    kv = jnp.concatenate(norms, axis=1)
    q = norms[2]
    B, Sq, E = q.shape
    Skv = kv.shape[1]
    H = num_heads
    D = E // H
    Q = q @ wq.T + b_qkv[0]
    K = kv @ wk.T + b_qkv[1]
    V = kv @ wv.T + b_qkv[2]
    Qh = Q.reshape(B, Sq, H, D).transpose(0, 2, 1, 3)
    Kh = K.reshape(B, Skv, H, D).transpose(0, 2, 1, 3)
    Vh = V.reshape(B, Skv, H, D).transpose(0, 2, 1, 3)
    s = jnp.einsum('bhqd,bhkd->bhqk', Qh, Kh) / jnp.sqrt(D)
    p = jax.nn.softmax(s, axis=-1)
    o = jnp.einsum('bhqk,bhkd->bhqd', p, Vh).transpose(0, 2, 1, 3).reshape(B, Sq, E)
    return o @ wo.T + bo.reshape(1, 1, E) + q


if __name__ == "__main__":
    # batch=2, seq=8 per feature, embed=256, 2 heads (head_dim=128 so every
    # head slice / store in the kernel is 128-lane aligned and fully dense).
    B, S, E, H = 2, 8, 256, 2
    key = jax.random.PRNGKey(0)
    ks = jax.random.split(key, 12)

    features = [jax.random.normal(ks[i], (B, S, E), dtype=jnp.float32)
                for i in range(3)]
    ln_gamma = 1.0 + 0.1 * jax.random.normal(ks[3], (3, E), dtype=jnp.float32)
    ln_beta = 0.1 * jax.random.normal(ks[4], (3, E), dtype=jnp.float32)
    wq = jax.random.normal(ks[5], (E, E), dtype=jnp.float32) / jnp.sqrt(E)
    wk = jax.random.normal(ks[6], (E, E), dtype=jnp.float32) / jnp.sqrt(E)
    wv = jax.random.normal(ks[7], (E, E), dtype=jnp.float32) / jnp.sqrt(E)
    wo = jax.random.normal(ks[8], (E, E), dtype=jnp.float32) / jnp.sqrt(E)
    b_qkv = 0.1 * jax.random.normal(ks[9], (3, E), dtype=jnp.float32)
    bo = 0.1 * jax.random.normal(ks[10], (E,), dtype=jnp.float32)

    out = cross_attention_fusion(features, ln_gamma, ln_beta,
                                 wq, wk, wv, b_qkv, wo, bo, num_heads=H)
    out = jax.block_until_ready(out)

    ref = cross_attention_fusion_ref(features, ln_gamma, ln_beta,
                                     wq, wk, wv, b_qkv, wo, bo, num_heads=H)
    assert out.shape == (B, S, E) and out.dtype == features[2].dtype
    max_err = float(jnp.max(jnp.abs(out - ref)))
    assert jnp.allclose(out, ref, atol=1e-3, rtol=1e-3), max_err
    print("KERNEL_OK")
</pallas_src>

<mosaic_0001>
module attributes {stable_mosaic.version = 11 : i64} {
  func.func @caf_kernel(%arg0: i32, %arg1: memref<1x8x256xf32, #tpu.memory_space<vmem>>, %arg2: memref<1x8x256xf32, #tpu.memory_space<vmem>>, %arg3: memref<1x8x256xf32, #tpu.memory_space<vmem>>, %arg4: memref<3x256xf32, #tpu.memory_space<vmem>>, %arg5: memref<3x256xf32, #tpu.memory_space<vmem>>, %arg6: memref<256x256xf32, #tpu.memory_space<vmem>>, %arg7: memref<256x256xf32, #tpu.memory_space<vmem>>, %arg8: memref<256x256xf32, #tpu.memory_space<vmem>>, %arg9: memref<1x256xf32, #tpu.memory_space<vmem>>, %arg10: memref<1x256xf32, #tpu.memory_space<vmem>>, %arg11: memref<1x256xf32, #tpu.memory_space<vmem>>, %arg12: memref<256x256xf32, #tpu.memory_space<vmem>>, %arg13: memref<1x256xf32, #tpu.memory_space<vmem>>, %arg14: memref<1x8x256xf32, #tpu.memory_space<vmem>>, %arg15: memref<1x24x256xf32, #tpu.memory_space<vmem>>, %arg16: memref<1x8x256xf32, #tpu.memory_space<vmem>>, %arg17: memref<1x24x256xf32, #tpu.memory_space<vmem>>, %arg18: memref<1x24x256xf32, #tpu.memory_space<vmem>>, %arg19: memref<1x8x256xf32, #tpu.memory_space<vmem>>) attributes {dimension_semantics = [#tpu.dimension_semantics<parallel>], iteration_bounds = array<i64: 2>, scalar_prefetch = 0 : i64, scratch_operands = 5 : i64, tpu.core_type = #tpu.core_type<tc>, window_params = [{transform_indices = @transform_0, window_bounds = array<i64: 1, 8, 256>}, {transform_indices = @transform_1, window_bounds = array<i64: 1, 8, 256>}, {transform_indices = @transform_2, window_bounds = array<i64: 1, 8, 256>}, {pipeline_mode = #tpu.pipeline_mode<synchronous>, transform_indices = @transform_3, window_bounds = array<i64: 3, 256>}, {pipeline_mode = #tpu.pipeline_mode<synchronous>, transform_indices = @transform_4, window_bounds = array<i64: 3, 256>}, {pipeline_mode = #tpu.pipeline_mode<synchronous>, transform_indices = @transform_5, window_bounds = array<i64: 256, 256>}, {pipeline_mode = #tpu.pipeline_mode<synchronous>, transform_indices = @transform_6, window_bounds = array<i64: 256, 256>}, {pipeline_mode = #tpu.pipeline_mode<synchronous>, transform_indices = @transform_7, window_bounds = array<i64: 256, 256>}, {pipeline_mode = #tpu.pipeline_mode<synchronous>, transform_indices = @transform_8, window_bounds = array<i64: 1, 256>}, {pipeline_mode = #tpu.pipeline_mode<synchronous>, transform_indices = @transform_9, window_bounds = array<i64: 1, 256>}, {pipeline_mode = #tpu.pipeline_mode<synchronous>, transform_indices = @transform_10, window_bounds = array<i64: 1, 256>}, {pipeline_mode = #tpu.pipeline_mode<synchronous>, transform_indices = @transform_11, window_bounds = array<i64: 256, 256>}, {pipeline_mode = #tpu.pipeline_mode<synchronous>, transform_indices = @transform_12, window_bounds = array<i64: 1, 256>}, {transform_indices = @transform_13, window_bounds = array<i64: 1, 8, 256>}]} {
    %c0 = arith.constant 0 : index
    %c0_0 = arith.constant 0 : index
    %0 = vector.load %arg4[%c0, %c0_0] : memref<3x256xf32, #tpu.memory_space<vmem>>, vector<3x256xf32>
    %c0_1 = arith.constant 0 : index
    %c0_2 = arith.constant 0 : index
    %1 = vector.load %arg5[%c0_1, %c0_2] : memref<3x256xf32, #tpu.memory_space<vmem>>, vector<3x256xf32>
    %c0_3 = arith.constant 0 : index
    %c0_4 = arith.constant 0 : index
    %c0_5 = arith.constant 0 : index
    %2 = vector.load %arg1[%c0_3, %c0_4, %c0_5] : memref<1x8x256xf32, #tpu.memory_space<vmem>>, vector<1x8x256xf32>
    %cst = arith.constant dense<0.000000e+00> : vector<1x8xf32>
    %3 = vector.multi_reduction <add>, %2, %cst [2] : vector<1x8x256xf32> to vector<1x8xf32>
    %4 = vector.shape_cast %3 : vector<1x8xf32> to vector<1x8x1xf32>
    %cst_6 = arith.constant 2.560000e+02 : f32
    %5 = vector.broadcast %cst_6 : f32 to vector<1x8x1xf32>
    %6 = arith.divf %4, %5 : vector<1x8x1xf32>
    %7 = vector.broadcast %6 : vector<1x8x1xf32> to vector<1x8x256xf32>
    %8 = arith.subf %2, %7 : vector<1x8x256xf32>
    %9 = arith.mulf %8, %8 : vector<1x8x256xf32>
    %cst_7 = arith.constant dense<0.000000e+00> : vector<1x8xf32>
    %10 = vector.multi_reduction <add>, %9, %cst_7 [2] : vector<1x8x256xf32> to vector<1x8xf32>
    %11 = vector.shape_cast %10 : vector<1x8xf32> to vector<1x8x1xf32>
    %cst_8 = arith.constant 2.560000e+02 : f32
    %12 = vector.broadcast %cst_8 : f32 to vector<1x8x1xf32>
    %13 = arith.divf %11, %12 : vector<1x8x1xf32>
    %14 = vector.extract_strided_slice %0 {offsets = [0, 0], sizes = [1, 256], strides = [1, 1]} : vector<3x256xf32> to vector<1x256xf32>
    %15 = vector.shape_cast %14 : vector<1x256xf32> to vector<1x1x256xf32>
    %16 = vector.extract_strided_slice %1 {offsets = [0, 0], sizes = [1, 256], strides = [1, 1]} : vector<3x256xf32> to vector<1x256xf32>
    %17 = vector.shape_cast %16 : vector<1x256xf32> to vector<1x1x256xf32>
    %18 = vector.broadcast %6 : vector<1x8x1xf32> to vector<1x8x256xf32>
    %19 = arith.subf %2, %18 : vector<1x8x256xf32>
    %cst_9 = arith.constant 9.99999974E-6 : f32
    %20 = vector.broadcast %cst_9 : f32 to vector<1x8x1xf32>
    %21 = arith.addf %13, %20 : vector<1x8x1xf32>
    %22 = math.rsqrt %21 : vector<1x8x1xf32>
    %23 = vector.broadcast %22 : vector<1x8x1xf32> to vector<1x8x256xf32>
    %24 = arith.mulf %19, %23 : vector<1x8x256xf32>
    %25 = vector.broadcast %15 : vector<1x1x256xf32> to vector<1x8x256xf32>
    %26 = arith.mulf %24, %25 : vector<1x8x256xf32>
    %27 = vector.broadcast %17 : vector<1x1x256xf32> to vector<1x8x256xf32>
    %28 = arith.addf %26, %27 : vector<1x8x256xf32>
    %c0_10 = arith.constant 0 : index
    %c0_11 = arith.constant 0 : index
    %c0_12 = arith.constant 0 : index
    %29 = vector.load %arg2[%c0_10, %c0_11, %c0_12] : memref<1x8x256xf32, #tpu.memory_space<vmem>>, vector<1x8x256xf32>
    %cst_13 = arith.constant dense<0.000000e+00> : vector<1x8xf32>
    %30 = vector.multi_reduction <add>, %29, %cst_13 [2] : vector<1x8x256xf32> to vector<1x8xf32>
    %31 = vector.shape_cast %30 : vector<1x8xf32> to vector<1x8x1xf32>
    %cst_14 = arith.constant 2.560000e+02 : f32
    %32 = vector.broadcast %cst_14 : f32 to vector<1x8x1xf32>
    %33 = arith.divf %31, %32 : vector<1x8x1xf32>
    %34 = vector.broadcast %33 : vector<1x8x1xf32> to vector<1x8x256xf32>
    %35 = arith.subf %29, %34 : vector<1x8x256xf32>
    %36 = arith.mulf %35, %35 : vector<1x8x256xf32>
    %cst_15 = arith.constant dense<0.000000e+00> : vector<1x8xf32>
    %37 = vector.multi_reduction <add>, %36, %cst_15 [2] : vector<1x8x256xf32> to vector<1x8xf32>
    %38 = vector.shape_cast %37 : vector<1x8xf32> to vector<1x8x1xf32>
    %cst_16 = arith.constant 2.560000e+02 : f32
    %39 = vector.broadcast %cst_16 : f32 to vector<1x8x1xf32>
    %40 = arith.divf %38, %39 : vector<1x8x1xf32>
    %41 = vector.extract_strided_slice %0 {offsets = [1, 0], sizes = [1, 256], strides = [1, 1]} : vector<3x256xf32> to vector<1x256xf32>
    %42 = vector.shape_cast %41 : vector<1x256xf32> to vector<1x1x256xf32>
    %43 = vector.extract_strided_slice %1 {offsets = [1, 0], sizes = [1, 256], strides = [1, 1]} : vector<3x256xf32> to vector<1x256xf32>
    %44 = vector.shape_cast %43 : vector<1x256xf32> to vector<1x1x256xf32>
    %45 = vector.broadcast %33 : vector<1x8x1xf32> to vector<1x8x256xf32>
    %46 = arith.subf %29, %45 : vector<1x8x256xf32>
    %cst_17 = arith.constant 9.99999974E-6 : f32
    %47 = vector.broadcast %cst_17 : f32 to vector<1x8x1xf32>
    %48 = arith.addf %40, %47 : vector<1x8x1xf32>
    %49 = math.rsqrt %48 : vector<1x8x1xf32>
    %50 = vector.broadcast %49 : vector<1x8x1xf32> to vector<1x8x256xf32>
    %51 = arith.mulf %46, %50 : vector<1x8x256xf32>
    %52 = vector.broadcast %42 : vector<1x1x256xf32> to vector<1x8x256xf32>
    %53 = arith.mulf %51, %52 : vector<1x8x256xf32>
    %54 = vector.broadcast %44 : vector<1x1x256xf32> to vector<1x8x256xf32>
    %55 = arith.addf %53, %54 : vector<1x8x256xf32>
    %c0_18 = arith.constant 0 : index
    %c0_19 = arith.constant 0 : index
    %c0_20 = arith.constant 0 : index
    %56 = vector.load %arg3[%c0_18, %c0_19, %c0_20] : memref<1x8x256xf32, #tpu.memory_space<vmem>>, vector<1x8x256xf32>
    %cst_21 = arith.constant dense<0.000000e+00> : vector<1x8xf32>
    %57 = vector.multi_reduction <add>, %56, %cst_21 [2] : vector<1x8x256xf32> to vector<1x8xf32>
    %58 = vector.shape_cast %57 : vector<1x8xf32> to vector<1x8x1xf32>
    %cst_22 = arith.constant 2.560000e+02 : f32
    %59 = vector.broadcast %cst_22 : f32 to vector<1x8x1xf32>
    %60 = arith.divf %58, %59 : vector<1x8x1xf32>
    %61 = vector.broadcast %60 : vector<1x8x1xf32> to vector<1x8x256xf32>
    %62 = arith.subf %56, %61 : vector<1x8x256xf32>
    %63 = arith.mulf %62, %62 : vector<1x8x256xf32>
    %cst_23 = arith.constant dense<0.000000e+00> : vector<1x8xf32>
    %64 = vector.multi_reduction <add>, %63, %cst_23 [2] : vector<1x8x256xf32> to vector<1x8xf32>
    %65 = vector.shape_cast %64 : vector<1x8xf32> to vector<1x8x1xf32>
    %cst_24 = arith.constant 2.560000e+02 : f32
    %66 = vector.broadcast %cst_24 : f32 to vector<1x8x1xf32>
    %67 = arith.divf %65, %66 : vector<1x8x1xf32>
    %68 = vector.extract_strided_slice %0 {offsets = [2, 0], sizes = [1, 256], strides = [1, 1]} : vector<3x256xf32> to vector<1x256xf32>
    %69 = vector.shape_cast %68 : vector<1x256xf32> to vector<1x1x256xf32>
    %70 = vector.extract_strided_slice %1 {offsets = [2, 0], sizes = [1, 256], strides = [1, 1]} : vector<3x256xf32> to vector<1x256xf32>
    %71 = vector.shape_cast %70 : vector<1x256xf32> to vector<1x1x256xf32>
    %72 = vector.broadcast %60 : vector<1x8x1xf32> to vector<1x8x256xf32>
    %73 = arith.subf %56, %72 : vector<1x8x256xf32>
    %cst_25 = arith.constant 9.99999974E-6 : f32
    %74 = vector.broadcast %cst_25 : f32 to vector<1x8x1xf32>
    %75 = arith.addf %67, %74 : vector<1x8x1xf32>
    %76 = math.rsqrt %75 : vector<1x8x1xf32>
    %77 = vector.broadcast %76 : vector<1x8x1xf32> to vector<1x8x256xf32>
    %78 = arith.mulf %73, %77 : vector<1x8x256xf32>
    %79 = vector.broadcast %69 : vector<1x1x256xf32> to vector<1x8x256xf32>
    %80 = arith.mulf %78, %79 : vector<1x8x256xf32>
    %81 = vector.broadcast %71 : vector<1x1x256xf32> to vector<1x8x256xf32>
    %82 = arith.addf %80, %81 : vector<1x8x256xf32>
    %c0_26 = arith.constant 0 : index
    %c0_27 = arith.constant 0 : index
    %c0_28 = arith.constant 0 : index
    %83 = vector.load %arg15[%c0_26, %c0_27, %c0_28] : memref<1x24x256xf32, #tpu.memory_space<vmem>>, vector<1x8x256xf32>
    tpu.vector_store %arg15[%c0_26, %c0_27, %c0_28], %28 {strides = array<i32>} : memref<1x24x256xf32, #tpu.memory_space<vmem>>, vector<1x8x256xf32>,
    %c0_29 = arith.constant 0 : index
    %c8 = arith.constant 8 : index
    %c0_30 = arith.constant 0 : index
    %84 = vector.load %arg15[%c0_29, %c8, %c0_30] : memref<1x24x256xf32, #tpu.memory_space<vmem>>, vector<1x8x256xf32>
    tpu.vector_store %arg15[%c0_29, %c8, %c0_30], %55 {strides = array<i32>} : memref<1x24x256xf32, #tpu.memory_space<vmem>>, vector<1x8x256xf32>,
    %c0_31 = arith.constant 0 : index
    %c16 = arith.constant 16 : index
    %c0_32 = arith.constant 0 : index
    %85 = vector.load %arg15[%c0_31, %c16, %c0_32] : memref<1x24x256xf32, #tpu.memory_space<vmem>>, vector<1x8x256xf32>
    tpu.vector_store %arg15[%c0_31, %c16, %c0_32], %82 {strides = array<i32>} : memref<1x24x256xf32, #tpu.memory_space<vmem>>, vector<1x8x256xf32>,
    %86 = vector.shape_cast %82 : vector<1x8x256xf32> to vector<8x256xf32>
    %c0_33 = arith.constant 0 : index
    %c0_34 = arith.constant 0 : index
    %c0_35 = arith.constant 0 : index
    %87 = vector.load %arg15[%c0_33, %c0_34, %c0_35] : memref<1x24x256xf32, #tpu.memory_space<vmem>>, vector<1x24x256xf32>
    %88 = vector.shape_cast %87 : vector<1x24x256xf32> to vector<24x256xf32>
    %c0_36 = arith.constant 0 : index
    %c0_37 = arith.constant 0 : index
    %89 = vector.load %arg6[%c0_36, %c0_37] : memref<256x256xf32, #tpu.memory_space<vmem>>, vector<256x256xf32>
    %cst_38 = arith.constant dense<0.000000e+00> : vector<8x256xf32>
    %90 = tpu.matmul %86, %89, %cst_38 {dimension_numbers = #tpu.dot_dimension_numbers<[1], [0], [0], [1], [0, 0, 1, 1], [], []>} : vector<8x256xf32>, vector<256x256xf32>, vector<8x256xf32> -> vector<8x256xf32>
    %c0_39 = arith.constant 0 : index
    %c0_40 = arith.constant 0 : index
    %91 = vector.load %arg9[%c0_39, %c0_40] : memref<1x256xf32, #tpu.memory_space<vmem>>, vector<1x256xf32>
    %92 = vector.broadcast %91 : vector<1x256xf32> to vector<8x256xf32>
    %93 = arith.addf %90, %92 : vector<8x256xf32>
    %c0_41 = arith.constant 0 : index
    %c0_42 = arith.constant 0 : index
    %94 = vector.load %arg7[%c0_41, %c0_42] : memref<256x256xf32, #tpu.memory_space<vmem>>, vector<256x256xf32>
    %cst_43 = arith.constant dense<0.000000e+00> : vector<24x256xf32>
    %95 = tpu.matmul %88, %94, %cst_43 {dimension_numbers = #tpu.dot_dimension_numbers<[1], [0], [0], [1], [0, 0, 1, 1], [], []>} : vector<24x256xf32>, vector<256x256xf32>, vector<24x256xf32> -> vector<24x256xf32>
    %c0_44 = arith.constant 0 : index
    %c0_45 = arith.constant 0 : index
    %96 = vector.load %arg10[%c0_44, %c0_45] : memref<1x256xf32, #tpu.memory_space<vmem>>, vector<1x256xf32>
    %97 = vector.broadcast %96 : vector<1x256xf32> to vector<24x256xf32>
    %98 = arith.addf %95, %97 : vector<24x256xf32>
    %c0_46 = arith.constant 0 : index
    %c0_47 = arith.constant 0 : index
    %99 = vector.load %arg8[%c0_46, %c0_47] : memref<256x256xf32, #tpu.memory_space<vmem>>, vector<256x256xf32>
    %cst_48 = arith.constant dense<0.000000e+00> : vector<24x256xf32>
    %100 = tpu.matmul %88, %99, %cst_48 {dimension_numbers = #tpu.dot_dimension_numbers<[1], [0], [0], [1], [0, 0, 1, 1], [], []>} : vector<24x256xf32>, vector<256x256xf32>, vector<24x256xf32> -> vector<24x256xf32>
    %c0_49 = arith.constant 0 : index
    %c0_50 = arith.constant 0 : index
    %101 = vector.load %arg11[%c0_49, %c0_50] : memref<1x256xf32, #tpu.memory_space<vmem>>, vector<1x256xf32>
    %102 = vector.broadcast %101 : vector<1x256xf32> to vector<24x256xf32>
    %103 = arith.addf %100, %102 : vector<24x256xf32>
    %104 = vector.shape_cast %93 : vector<8x256xf32> to vector<1x8x256xf32>
    %c0_51 = arith.constant 0 : index
    %c0_52 = arith.constant 0 : index
    %c0_53 = arith.constant 0 : index
    %105 = vector.load %arg16[%c0_51, %c0_52, %c0_53] : memref<1x8x256xf32, #tpu.memory_space<vmem>>, vector<1x8x256xf32>
    tpu.vector_store %arg16[%c0_51, %c0_52, %c0_53], %104 {strides = array<i32>} : memref<1x8x256xf32, #tpu.memory_space<vmem>>, vector<1x8x256xf32>,
    %106 = vector.shape_cast %98 : vector<24x256xf32> to vector<1x24x256xf32>
    %c0_54 = arith.constant 0 : index
    %c0_55 = arith.constant 0 : index
    %c0_56 = arith.constant 0 : index
    %107 = vector.load %arg17[%c0_54, %c0_55, %c0_56] : memref<1x24x256xf32, #tpu.memory_space<vmem>>, vector<1x24x256xf32>
    tpu.vector_store %arg17[%c0_54, %c0_55, %c0_56], %106 {strides = array<i32>} : memref<1x24x256xf32, #tpu.memory_space<vmem>>, vector<1x24x256xf32>,
    %108 = vector.shape_cast %103 : vector<24x256xf32> to vector<1x24x256xf32>
    %c0_57 = arith.constant 0 : index
    %c0_58 = arith.constant 0 : index
    %c0_59 = arith.constant 0 : index
    %109 = vector.load %arg18[%c0_57, %c0_58, %c0_59] : memref<1x24x256xf32, #tpu.memory_space<vmem>>, vector<1x24x256xf32>
    tpu.vector_store %arg18[%c0_57, %c0_58, %c0_59], %108 {strides = array<i32>} : memref<1x24x256xf32, #tpu.memory_space<vmem>>, vector<1x24x256xf32>,
    %c0_60 = arith.constant 0 : index
    %c0_61 = arith.constant 0 : index
    %c0_62 = arith.constant 0 : index
    %110 = vector.load %arg16[%c0_60, %c0_61, %c0_62] : memref<1x8x256xf32, #tpu.memory_space<vmem>>, vector<1x8x128xf32>
    %c0_63 = arith.constant 0 : index
    %c0_64 = arith.constant 0 : index
    %c0_65 = arith.constant 0 : index
    %111 = vector.load %arg17[%c0_63, %c0_64, %c0_65] : memref<1x24x256xf32, #tpu.memory_space<vmem>>, vector<1x24x128xf32>
    %c0_66 = arith.constant 0 : index
    %c0_67 = arith.constant 0 : index
    %c0_68 = arith.constant 0 : index
    %112 = vector.load %arg18[%c0_66, %c0_67, %c0_68] : memref<1x24x256xf32, #tpu.memory_space<vmem>>, vector<1x24x128xf32>
    "tpu.trace_start"() <{level = 10 : i32, message = "bqd,bkd->bqk"}> : () -> ()
    %cst_69 = arith.constant dense<0.000000e+00> : vector<1x8x24xf32>
    %113 = tpu.matmul %110, %111, %cst_69 {dimension_numbers = #tpu.dot_dimension_numbers<[2], [2], [1], [1], [0, 0, 0, 1, 1, 1], [0], [0]>} : vector<1x8x128xf32>, vector<1x24x128xf32>, vector<1x8x24xf32> -> vector<1x8x24xf32>
    "tpu.trace_stop"() : () -> ()
    %cst_70 = arith.constant 0.0883883461 : f32
    %114 = vector.broadcast %cst_70 : f32 to vector<1x8x24xf32>
    %115 = arith.mulf %113, %114 : vector<1x8x24xf32>
    %cst_71 = arith.constant dense<0xFF800000> : vector<1x8xf32>
    %116 = vector.multi_reduction <maximumf>, %115, %cst_71 [2] : vector<1x8x24xf32> to vector<1x8xf32>
    %117 = vector.shape_cast %116 : vector<1x8xf32> to vector<1x8x1xf32>
    %118 = vector.broadcast %117 : vector<1x8x1xf32> to vector<1x8x24xf32>
    %119 = arith.subf %115, %118 : vector<1x8x24xf32>
    %120 = math.exp %119 : vector<1x8x24xf32>
    %cst_72 = arith.constant dense<0.000000e+00> : vector<1x8xf32>
    %121 = vector.multi_reduction <add>, %120, %cst_72 [2] : vector<1x8x24xf32> to vector<1x8xf32>
    %122 = vector.shape_cast %121 : vector<1x8xf32> to vector<1x8x1xf32>
    "tpu.trace_start"() <{level = 10 : i32, message = "bqk,bkd->bqd"}> : () -> ()
    %cst_73 = arith.constant dense<0.000000e+00> : vector<1x8x128xf32>
    %123 = tpu.matmul %120, %112, %cst_73 {dimension_numbers = #tpu.dot_dimension_numbers<[2], [1], [1], [2], [0, 0, 0, 1, 1, 2], [0], [0]>} : vector<1x8x24xf32>, vector<1x24x128xf32>, vector<1x8x128xf32> -> vector<1x8x128xf32>
    "tpu.trace_stop"() : () -> ()
    %124 = tpu.reciprocal %122 : vector<1x8x1xf32> -> vector<1x8x1xf32>
    %125 = vector.broadcast %124 : vector<1x8x1xf32> to vector<1x8x128xf32>
    %126 = arith.mulf %123, %125 : vector<1x8x128xf32>
    %c0_74 = arith.constant 0 : index
    %c0_75 = arith.constant 0 : index
    %c0_76 = arith.constant 0 : index
    %127 = vector.load %arg19[%c0_74, %c0_75, %c0_76] : memref<1x8x256xf32, #tpu.memory_space<vmem>>, vector<1x8x128xf32>
    tpu.vector_store %arg19[%c0_74, %c0_75, %c0_76], %126 {strides = array<i32>} : memref<1x8x256xf32, #tpu.memory_space<vmem>>, vector<1x8x128xf32>,
    %c0_77 = arith.constant 0 : index
    %c0_78 = arith.constant 0 : index
    %c128 = arith.constant 128 : index
    %128 = vector.load %arg16[%c0_77, %c0_78, %c128] : memref<1x8x256xf32, #tpu.memory_space<vmem>>, vector<1x8x128xf32>
    %c0_79 = arith.constant 0 : index
    %c0_80 = arith.constant 0 : index
    %c128_81 = arith.constant 128 : index
    %129 = vector.load %arg17[%c0_79, %c0_80, %c128_81] : memref<1x24x256xf32, #tpu.memory_space<vmem>>, vector<1x24x128xf32>
    %c0_82 = arith.constant 0 : index
    %c0_83 = arith.constant 0 : index
    %c128_84 = arith.constant 128 : index
    %130 = vector.load %arg18[%c0_82, %c0_83, %c128_84] : memref<1x24x256xf32, #tpu.memory_space<vmem>>, vector<1x24x128xf32>
    "tpu.trace_start"() <{level = 10 : i32, message = "bqd,bkd->bqk"}> : () -> ()
    %cst_85 = arith.constant dense<0.000000e+00> : vector<1x8x24xf32>
    %131 = tpu.matmul %128, %129, %cst_85 {dimension_numbers = #tpu.dot_dimension_numbers<[2], [2], [1], [1], [0, 0, 0, 1, 1, 1], [0], [0]>} : vector<1x8x128xf32>, vector<1x24x128xf32>, vector<1x8x24xf32> -> vector<1x8x24xf32>
    "tpu.trace_stop"() : () -> ()
    %cst_86 = arith.constant 0.0883883461 : f32
    %132 = vector.broadcast %cst_86 : f32 to vector<1x8x24xf32>
    %133 = arith.mulf %131, %132 : vector<1x8x24xf32>
    %cst_87 = arith.constant dense<0xFF800000> : vector<1x8xf32>
    %134 = vector.multi_reduction <maximumf>, %133, %cst_87 [2] : vector<1x8x24xf32> to vector<1x8xf32>
    %135 = vector.shape_cast %134 : vector<1x8xf32> to vector<1x8x1xf32>
    %136 = vector.broadcast %135 : vector<1x8x1xf32> to vector<1x8x24xf32>
    %137 = arith.subf %133, %136 : vector<1x8x24xf32>
    %138 = math.exp %137 : vector<1x8x24xf32>
    %cst_88 = arith.constant dense<0.000000e+00> : vector<1x8xf32>
    %139 = vector.multi_reduction <add>, %138, %cst_88 [2] : vector<1x8x24xf32> to vector<1x8xf32>
    %140 = vector.shape_cast %139 : vector<1x8xf32> to vector<1x8x1xf32>
    "tpu.trace_start"() <{level = 10 : i32, message = "bqk,bkd->bqd"}> : () -> ()
    %cst_89 = arith.constant dense<0.000000e+00> : vector<1x8x128xf32>
    %141 = tpu.matmul %138, %130, %cst_89 {dimension_numbers = #tpu.dot_dimension_numbers<[2], [1], [1], [2], [0, 0, 0, 1, 1, 2], [0], [0]>} : vector<1x8x24xf32>, vector<1x24x128xf32>, vector<1x8x128xf32> -> vector<1x8x128xf32>
    "tpu.trace_stop"() : () -> ()
    %142 = tpu.reciprocal %140 : vector<1x8x1xf32> -> vector<1x8x1xf32>
    %143 = vector.broadcast %142 : vector<1x8x1xf32> to vector<1x8x128xf32>
    %144 = arith.mulf %141, %143 : vector<1x8x128xf32>
    %c0_90 = arith.constant 0 : index
    %c0_91 = arith.constant 0 : index
    %c128_92 = arith.constant 128 : index
    %145 = vector.load %arg19[%c0_90, %c0_91, %c128_92] : memref<1x8x256xf32, #tpu.memory_space<vmem>>, vector<1x8x128xf32>
    tpu.vector_store %arg19[%c0_90, %c0_91, %c128_92], %144 {strides = array<i32>} : memref<1x8x256xf32, #tpu.memory_space<vmem>>, vector<1x8x128xf32>,
    %c0_93 = arith.constant 0 : index
    %c0_94 = arith.constant 0 : index
    %c0_95 = arith.constant 0 : index
    %146 = vector.load %arg19[%c0_93, %c0_94, %c0_95] : memref<1x8x256xf32, #tpu.memory_space<vmem>>, vector<1x8x256xf32>
    %147 = vector.shape_cast %146 : vector<1x8x256xf32> to vector<8x256xf32>
    %c0_96 = arith.constant 0 : index
    %c0_97 = arith.constant 0 : index
    %148 = vector.load %arg12[%c0_96, %c0_97] : memref<256x256xf32, #tpu.memory_space<vmem>>, vector<256x256xf32>
    %cst_98 = arith.constant dense<0.000000e+00> : vector<8x256xf32>
    %149 = tpu.matmul %147, %148, %cst_98 {dimension_numbers = #tpu.dot_dimension_numbers<[1], [0], [0], [1], [0, 0, 1, 1], [], []>} : vector<8x256xf32>, vector<256x256xf32>, vector<8x256xf32> -> vector<8x256xf32>
    %c0_99 = arith.constant 0 : index
    %c0_100 = arith.constant 0 : index
    %150 = vector.load %arg13[%c0_99, %c0_100] : memref<1x256xf32, #tpu.memory_space<vmem>>, vector<1x256xf32>
    %151 = vector.broadcast %150 : vector<1x256xf32> to vector<8x256xf32>
    %152 = arith.addf %149, %151 : vector<8x256xf32>
    %153 = vector.shape_cast %152 : vector<8x256xf32> to vector<1x8x256xf32>
    %154 = arith.addf %153, %82 : vector<1x8x256xf32>
    %c0_101 = arith.constant 0 : index
    %c0_102 = arith.constant 0 : index
    %c0_103 = arith.constant 0 : index
    %155 = vector.load %arg14[%c0_101, %c0_102, %c0_103] : memref<1x8x256xf32, #tpu.memory_space<vmem>>, vector<1x8x256xf32>
    tpu.vector_store %arg14[%c0_101, %c0_102, %c0_103], %154 {strides = array<i32>} : memref<1x8x256xf32, #tpu.memory_space<vmem>>, vector<1x8x256xf32>,
    return
  }
  func.func @transform_0(%arg0: i32) -> (i32, i32, i32) {
    %c0_i32 = arith.constant 0 : i32
    %c0_i32_0 = arith.constant 0 : i32
    %c0_i32_1 = arith.constant 0 : i32
    return %arg0, %c0_i32, %c0_i32_0 : i32, i32, i32
  }
  func.func @transform_1(%arg0: i32) -> (i32, i32, i32) {
    %c0_i32 = arith.constant 0 : i32
    %c0_i32_0 = arith.constant 0 : i32
    %c0_i32_1 = arith.constant 0 : i32
    return %arg0, %c0_i32, %c0_i32_0 : i32, i32, i32
  }
  func.func @transform_2(%arg0: i32) -> (i32, i32, i32) {
    %c0_i32 = arith.constant 0 : i32
    %c0_i32_0 = arith.constant 0 : i32
    %c0_i32_1 = arith.constant 0 : i32
    return %arg0, %c0_i32, %c0_i32_0 : i32, i32, i32
  }
  func.func @transform_3(%arg0: i32) -> (i32, i32) {
    %c0_i32 = arith.constant 0 : i32
    %c0_i32_0 = arith.constant 0 : i32
    %c0_i32_1 = arith.constant 0 : i32
    return %c0_i32, %c0_i32_0 : i32, i32
  }
  func.func @transform_4(%arg0: i32) -> (i32, i32) {
    %c0_i32 = arith.constant 0 : i32
    %c0_i32_0 = arith.constant 0 : i32
    %c0_i32_1 = arith.constant 0 : i32
    return %c0_i32, %c0_i32_0 : i32, i32
  }
  func.func @transform_5(%arg0: i32) -> (i32, i32) {
    %c0_i32 = arith.constant 0 : i32
    %c0_i32_0 = arith.constant 0 : i32
    %c0_i32_1 = arith.constant 0 : i32
    return %c0_i32, %c0_i32_0 : i32, i32
  }
  func.func @transform_6(%arg0: i32) -> (i32, i32) {
    %c0_i32 = arith.constant 0 : i32
    %c0_i32_0 = arith.constant 0 : i32
    %c0_i32_1 = arith.constant 0 : i32
    return %c0_i32, %c0_i32_0 : i32, i32
  }
  func.func @transform_7(%arg0: i32) -> (i32, i32) {
    %c0_i32 = arith.constant 0 : i32
    %c0_i32_0 = arith.constant 0 : i32
    %c0_i32_1 = arith.constant 0 : i32
    return %c0_i32, %c0_i32_0 : i32, i32
  }
  func.func @transform_8(%arg0: i32) -> (i32, i32) {
    %c0_i32 = arith.constant 0 : i32
    %c0_i32_0 = arith.constant 0 : i32
    %c0_i32_1 = arith.constant 0 : i32
    return %c0_i32, %c0_i32_0 : i32, i32
  }
  func.func @transform_9(%arg0: i32) -> (i32, i32) {
    %c0_i32 = arith.constant 0 : i32
    %c0_i32_0 = arith.constant 0 : i32
    %c0_i32_1 = arith.constant 0 : i32
    return %c0_i32, %c0_i32_0 : i32, i32
  }
  func.func @transform_10(%arg0: i32) -> (i32, i32) {
    %c0_i32 = arith.constant 0 : i32
    %c0_i32_0 = arith.constant 0 : i32
    %c0_i32_1 = arith.constant 0 : i32
    return %c0_i32, %c0_i32_0 : i32, i32
  }
  func.func @transform_11(%arg0: i32) -> (i32, i32) {
    %c0_i32 = arith.constant 0 : i32
    %c0_i32_0 = arith.constant 0 : i32
    %c0_i32_1 = arith.constant 0 : i32
    return %c0_i32, %c0_i32_0 : i32, i32
  }
  func.func @transform_12(%arg0: i32) -> (i32, i32) {
    %c0_i32 = arith.constant 0 : i32
    %c0_i32_0 = arith.constant 0 : i32
    %c0_i32_1 = arith.constant 0 : i32
    return %c0_i32, %c0_i32_0 : i32, i32
  }
  func.func @transform_13(%arg0: i32) -> (i32, i32, i32) {
    %c0_i32 = arith.constant 0 : i32
    %c0_i32_0 = arith.constant 0 : i32
    %c0_i32_1 = arith.constant 0 : i32
    return %arg0, %c0_i32, %c0_i32_0 : i32, i32, i32
  }
}

</mosaic_0001>

<llo_original>
// kernel: tpu_custom_call.1
$region0: #{tpu_custom_call.1}
  #allocation0 [shape = 'u32[]', space=smem, size = 0x4, offset = 0x4, fixed_abs, tag = 'smem constant byte address 0x4 - core index']
  #allocation1 [shape = 'u32[144,128]{1,0:T(1,128)}', space=vmem, size = 0x12000, scoped, tag = 'internal scratch']
  #allocation2 [shape = 'f32[1,24,256]{2,1,0:T(8,128)}', space=vmem, size = 0x6000, scoped, tag = 'scratch operand']
  #allocation3 [shape = 'f32[1,8,256]{2,1,0:T(8,128)}', space=vmem, size = 0x2000, scoped, tag = 'scratch operand']
  #allocation4 [shape = 'f32[1,24,256]{2,1,0:T(8,128)}', space=vmem, size = 0x6000, scoped, tag = 'scratch operand']
  #allocation5 [shape = 'f32[1,24,256]{2,1,0:T(8,128)}', space=vmem, size = 0x6000, scoped, tag = 'scratch operand']
  #allocation6 [shape = 'f32[1,8,256]{2,1,0:T(8,128)}', space=vmem, size = 0x2000, scoped, tag = 'scratch operand']
  %s0 = inlined_call_operand.hbm [shape: f32[2,8,256], index: 0, kind: input, shape index: {}]
  %s1 = inlined_call_operand.hbm [shape: f32[2,8,256], index: 1, kind: input, shape index: {}]
  %s2 = inlined_call_operand.hbm [shape: f32[2,8,256], index: 2, kind: input, shape index: {}]
  %s3 = inlined_call_operand.vmem [shape: f32[3,256], index: 3, kind: input, shape index: {}]
  %s4 = inlined_call_operand.hbm [shape: f32[3,256], index: 4, kind: input, shape index: {}]
  %s5 = inlined_call_operand.hbm [shape: f32[256,256], index: 5, kind: input, shape index: {}]
  %s6 = inlined_call_operand.hbm [shape: f32[256,256], index: 6, kind: input, shape index: {}]
  %s7 = inlined_call_operand.hbm [shape: f32[256,256], index: 7, kind: input, shape index: {}]
  %s8 = inlined_call_operand.vmem [shape: f32[1,256], index: 8, kind: input, shape index: {}]
  %s9 = inlined_call_operand.vmem [shape: f32[1,256], index: 9, kind: input, shape index: {}]
  %s10 = inlined_call_operand.vmem [shape: f32[1,256], index: 10, kind: input, shape index: {}]
  %s11 = inlined_call_operand.hbm [shape: f32[256,256], index: 11, kind: input, shape index: {}]
  %s12 = inlined_call_operand.vmem [shape: f32[1,256], index: 12, kind: input, shape index: {}]
  %s13 = inlined_call_operand.hbm [shape: f32[2,8,256], index: 13, kind: output, shape index: {}]
  %s14 = sld [smem:[#allocation0]]
  $region117: #{tpu_custom_call.1} parent=0
    _
  %s16 = ssub.s32 1, %s14
  %s17 = scalar_select 0, %s16, %s14
  $region1: #{tpu_custom_call.1} parent=0
    #allocation7 [shape = 'u8[16384]{0}', space=vmem, size = 0x4000, scoped, tag = 'input window, operand 0']
    #allocation8 [shape = 's32[2]{0}', space=sflag, size = 0x8, scoped, tag = 'scoped memory for tpu_custom_call.1']
    #allocation9 [shape = 's32[2]{0}', space=sflag, size = 0x8, scoped, tag = 'scoped memory for tpu_custom_call.1']
    #allocation10 [shape = 'u8[16384]{0}', space=vmem, size = 0x4000, scoped, tag = 'input window, operand 1']
    #allocation11 [shape = 's32[2]{0}', space=sflag, size = 0x8, scoped, tag = 'scoped memory for tpu_custom_call.1']
    #allocation12 [shape = 'u8[16384]{0}', space=vmem, size = 0x4000, scoped, tag = 'input window, operand 2']
    #allocation13 [shape = 'u8[4096]{0}', space=vmem, size = 0x1000, scoped, tag = 'input window, operand 4, single buffered']
    #allocation14 [shape = 's32[1]{0}', space=sflag, size = 0x4, scoped, tag = 'scoped memory for tpu_custom_call.1']
    #allocation15 [shape = 'u8[262144]{0}', space=vmem, size = 0x40000, scoped, tag = 'input window, operand 5, single buffered']
    #allocation16 [shape = 'u8[262144]{0}', space=vmem, size = 0x40000, scoped, tag = 'input window, operand 6, single buffered']
    #allocation17 [shape = 's32[1]{0}', space=sflag, size = 0x4, scoped, tag = 'scoped memory for tpu_custom_call.1']
    #allocation18 [shape = 'u8[262144]{0}', space=vmem, size = 0x40000, scoped, tag = 'input window, operand 7, single buffered']
    #allocation19 [shape = 'u8[262144]{0}', space=vmem, size = 0x40000, scoped, tag = 'input window, operand 11, single buffered']
    #allocation20 [shape = 's32[1]{0}', space=sflag, size = 0x4, scoped, tag = 'scoped memory for tpu_custom_call.1']
    #allocation21 [shape = 'u8[16384]{0}', space=vmem, size = 0x4000, scoped, tag = 'output window, operand 0']
    %18 = vsyncpa [#allocation8], 0
    %s19 = scalar_lea.sflag [#allocation8], 1
    %20 = vsyncpa %s19, 0
    %21 = vsyncpa [#allocation11], 0
    %s22 = scalar_lea.sflag [#allocation11], 1
    %23 = vsyncpa %s22, 0
    %24 = vsyncpa [#allocation14], 0
    %25 = vsyncpa [#allocation17], 0
    %26 = vsyncpa [#allocation20], 0
    %27 = vsyncpa [#allocation9], 0
    %s28 = scalar_lea.sflag [#allocation9], 1
    %29 = vsyncpa %s28, 0
    loop: start=0, step=1, limit=4
    $region2: #{tpu_custom_call.1} parent=1 // loop_pre_header
      _
    $region3: #{tpu_custom_call.1} parent=1 // loop_header
      %s31 = sphi 0, %s35
      %p32 = scmp.ge.s32.totalorder %s31, 4
      %s41 = sphi 0, %s43
      %s44 = sphi 0, %s41
      %s45 = sphi 0, %s44
      %s61 = sphi 0, %s45
      %s67 = sphi 0, %s69
      %s70 = sphi 0, %s67
      %s71 = sphi 0, %s70
      %s87 = sphi 0, %s71
      %s93 = sphi 0, %s95
      %s96 = sphi 0, %s93
      %s97 = sphi 0, %s96
      %s113 = sphi 0, %s97
      %s117 = sphi 0, %s117
      %s119 = sphi 0, %s117
      %s120 = sphi 0, %s119
      %s134 = sphi 0, %s120
      %s138 = sphi 0, %s138
      %s140 = sphi 0, %s138
      %s141 = sphi 0, %s140
      %s155 = sphi 0, %s141
      %s159 = sphi 0, %s159
      %s161 = sphi 0, %s159
      %s162 = sphi 0, %s161
      %s176 = sphi 0, %s162
      %s180 = sphi 0, %s180
      %s182 = sphi 0, %s180
      %s183 = sphi 0, %s182
      %s197 = sphi 0, %s183
      %s201 = sphi 0, %s201
      %s203 = sphi 0, %s201
      %s204 = sphi 0, %s203
      %s218 = sphi 0, %s204
      %s222 = sphi 0, %s222
      %s224 = sphi 0, %s222
      %s225 = sphi 0, %s224
      %s239 = sphi 0, %s225
      %s243 = sphi 0, %s243
      %s245 = sphi 0, %s243
      %s246 = sphi 0, %s245
      %s260 = sphi 0, %s246
      %s264 = sphi 0, %s264
      %s266 = sphi 0, %s264
      %s267 = sphi 0, %s266
      %s281 = sphi 0, %s267
      %s285 = sphi 0, %s285
      %s287 = sphi 0, %s285
      %s288 = sphi 0, %s287
      %s302 = sphi 0, %s288
      %s306 = sphi 0, %s306
      %s308 = sphi 0, %s306
      %s309 = sphi 0, %s308
      %s323 = sphi 0, %s309
      %s329 = sphi 0, %s331
      %s332 = sphi 0, %s329
      %s333 = sphi 0, %s332
      %s349 = sphi 0, %s333
    $region4: #{tpu_custom_call.1} parent=1 // loop_header_branch
      %34 = sbr.rel (%p32) target = $region8
    $region5: #{tpu_custom_call.1} parent=1 // loop_body
      %s36 = ssub.s32 %s31, 1
      %s37 = ssub.s32 %s31, 2
      %s38 = sadd.s32 %s31, 1
      %s39 = ssub.s32 %s31, %s38
      %p40 = scmp.eq.s32.totalorder %s39, 0
      %s42 = sadd.s32 %s41, 1
      %s43 = scalar_select %p40, %s41, %s42
      %p46 = pneg %p40
      %p47 = scmp.eq.s32.totalorder %s31, 1
      %p48 = por %p46, %p47
      %p49 = scmp.ne.s32.totalorder %s41, %s44
      %p50 = scmp.eq.s32.totalorder %s31, 0
      %p51 = por %p49, %p50
      %p52 = scmp.ne.s32.totalorder %s41, %s44
      %p53 = scmp.eq.s32.totalorder %s36, 1
      %p54 = por %p52, %p53
      %p55 = scmp.ne.s32.totalorder %s44, %s45
      %p56 = scmp.eq.s32.totalorder %s36, 0
      %p57 = por %p55, %p56
      %p58 = scmp.ne.s32.totalorder %s44, %s45
      %p59 = scmp.eq.s32.totalorder %s37, 1
      %p60 = por %p58, %p59
      %p62 = scmp.ne.s32.totalorder %s45, %s61
      %p63 = scmp.eq.s32.totalorder %s37, 0
      %p64 = por %p62, %p63
      %s65 = ssub.s32 %s31, %s38
      %p66 = scmp.eq.s32.totalorder %s65, 0
      %s68 = sadd.s32 %s67, 1
      %s69 = scalar_select %p66, %s67, %s68
      %p72 = pneg %p66
      %p73 = scmp.eq.s32.totalorder %s31, 1
      %p74 = por %p72, %p73
      %p75 = scmp.ne.s32.totalorder %s67, %s70
      %p76 = scmp.eq.s32.totalorder %s31, 0
      %p77 = por %p75, %p76
      %p78 = scmp.ne.s32.totalorder %s67, %s70
      %p79 = scmp.eq.s32.totalorder %s36, 1
      %p80 = por %p78, %p79
      %p81 = scmp.ne.s32.totalorder %s70, %s71
      %p82 = scmp.eq.s32.totalorder %s36, 0
      %p83 = por %p81, %p82
      %p84 = scmp.ne.s32.totalorder %s70, %s71
      %p85 = scmp.eq.s32.totalorder %s37, 1
      %p86 = por %p84, %p85
      %p88 = scmp.ne.s32.totalorder %s71, %s87
      %p89 = scmp.eq.s32.totalorder %s37, 0
      %p90 = por %p88, %p89
      %s91 = ssub.s32 %s31, %s38
      %p92 = scmp.eq.s32.totalorder %s91, 0
      %s94 = sadd.s32 %s93, 1
      %s95 = scalar_select %p92, %s93, %s94
      %p98 = pneg %p92
      %p99 = scmp.eq.s32.totalorder %s31, 1
      %p100 = por %p98, %p99
      %p101 = scmp.ne.s32.totalorder %s93, %s96
      %p102 = scmp.eq.s32.totalorder %s31, 0
      %p103 = por %p101, %p102
      %p104 = scmp.ne.s32.totalorder %s93, %s96
      %p105 = scmp.eq.s32.totalorder %s36, 1
      %p106 = por %p104, %p105
      %p107 = scmp.ne.s32.totalorder %s96, %s97
      %p108 = scmp.eq.s32.totalorder %s36, 0
      %p109 = por %p107, %p108
      %p110 = scmp.ne.s32.totalorder %s96, %s97
      %p111 = scmp.eq.s32.totalorder %s37, 1
      %p112 = por %p110, %p111
      %p114 = scmp.ne.s32.totalorder %s97, %s113
      %p115 = scmp.eq.s32.totalorder %s37, 0
      %p116 = por %p114, %p115
      %s118 = sadd.s32 %s117, 1
      %p121 = scmp.eq.s32.totalorder %s31, 1
      %p122 = scmp.ne.s32.totalorder %s117, %s119
      %p123 = scmp.eq.s32.totalorder %s31, 0
      %p124 = por %p122, %p123
      %p125 = scmp.ne.s32.totalorder %s117, %s119
      %p126 = scmp.eq.s32.totalorder %s36, 1
      %p127 = por %p125, %p126
      %p128 = scmp.ne.s32.totalorder %s119, %s120
      %p129 = scmp.eq.s32.totalorder %s36, 0
      %p130 = por %p128, %p129
      %p131 = scmp.ne.s32.totalorder %s119, %s120
      %p132 = scmp.eq.s32.totalorder %s37, 1
      %p133 = por %p131, %p132
      %p135 = scmp.ne.s32.totalorder %s120, %s134
      %p136 = scmp.eq.s32.totalorder %s37, 0
      %p137 = por %p135, %p136
      %s139 = sadd.s32 %s138, 1
      %p142 = scmp.eq.s32.totalorder %s31, 1
      %p143 = scmp.ne.s32.totalorder %s138, %s140
      %p144 = scmp.eq.s32.totalorder %s31, 0
      %p145 = por %p143, %p144
      %p146 = scmp.ne.s32.totalorder %s138, %s140
      %p147 = scmp.eq.s32.totalorder %s36, 1
      %p148 = por %p146, %p147
      %p149 = scmp.ne.s32.totalorder %s140, %s141
      %p150 = scmp.eq.s32.totalorder %s36, 0
      %p151 = por %p149, %p150
      %p152 = scmp.ne.s32.totalorder %s140, %s141
      %p153 = scmp.eq.s32.totalorder %s37, 1
      %p154 = por %p152, %p153
      %p156 = scmp.ne.s32.totalorder %s141, %s155
      %p157 = scmp.eq.s32.totalorder %s37, 0
      %p158 = por %p156, %p157
      %s160 = sadd.s32 %s159, 1
      %p163 = scmp.eq.s32.totalorder %s31, 1
      %p164 = scmp.ne.s32.totalorder %s159, %s161
      %p165 = scmp.eq.s32.totalorder %s31, 0
      %p166 = por %p164, %p165
      %p167 = scmp.ne.s32.totalorder %s159, %s161
      %p168 = scmp.eq.s32.totalorder %s36, 1
      %p169 = por %p167, %p168
      %p170 = scmp.ne.s32.totalorder %s161, %s162
      %p171 = scmp.eq.s32.totalorder %s36, 0
      %p172 = por %p170, %p171
      %p173 = scmp.ne.s32.totalorder %s161, %s162
      %p174 = scmp.eq.s32.totalorder %s37, 1
      %p175 = por %p173, %p174
      %p177 = scmp.ne.s32.totalorder %s162, %s176
      %p178 = scmp.eq.s32.totalorder %s37, 0
      %p179 = por %p177, %p178
      %s181 = sadd.s32 %s180, 1
      %p184 = scmp.eq.s32.totalorder %s31, 1
      %p185 = scmp.ne.s32.totalorder %s180, %s182
      %p186 = scmp.eq.s32.totalorder %s31, 0
      %p187 = por %p185, %p186
      %p188 = scmp.ne.s32.totalorder %s180, %s182
      %p189 = scmp.eq.s32.totalorder %s36, 1
      %p190 = por %p188, %p189
      %p191 = scmp.ne.s32.totalorder %s182, %s183
      %p192 = scmp.eq.s32.totalorder %s36, 0
      %p193 = por %p191, %p192
      %p194 = scmp.ne.s32.totalorder %s182, %s183
      %p195 = scmp.eq.s32.totalorder %s37, 1
      %p196 = por %p194, %p195
      %p198 = scmp.ne.s32.totalorder %s183, %s197
      %p199 = scmp.eq.s32.totalorder %s37, 0
      %p200 = por %p198, %p199
      %s202 = sadd.s32 %s201, 1
      %p205 = scmp.eq.s32.totalorder %s31, 1
      %p206 = scmp.ne.s32.totalorder %s201, %s203
      %p207 = scmp.eq.s32.totalorder %s31, 0
      %p208 = por %p206, %p207
      %p209 = scmp.ne.s32.totalorder %s201, %s203
      %p210 = scmp.eq.s32.totalorder %s36, 1
      %p211 = por %p209, %p210
      %p212 = scmp.ne.s32.totalorder %s203, %s204
      %p213 = scmp.eq.s32.totalorder %s36, 0
      %p214 = por %p212, %p213
      %p215 = scmp.ne.s32.totalorder %s203, %s204
      %p216 = scmp.eq.s32.totalorder %s37, 1
      %p217 = por %p215, %p216
      %p219 = scmp.ne.s32.totalorder %s204, %s218
      %p220 = scmp.eq.s32.totalorder %s37, 0
      %p221 = por %p219, %p220
      %s223 = sadd.s32 %s222, 1
      %p226 = scmp.eq.s32.totalorder %s31, 1
      %p227 = scmp.ne.s32.totalorder %s222, %s224
      %p228 = scmp.eq.s32.totalorder %s31, 0
      %p229 = por %p227, %p228
      %p230 = scmp.ne.s32.totalorder %s222, %s224
      %p231 = scmp.eq.s32.totalorder %s36, 1
      %p232 = por %p230, %p231
      %p233 = scmp.ne.s32.totalorder %s224, %s225
      %p234 = scmp.eq.s32.totalorder %s36, 0
      %p235 = por %p233, %p234
      %p236 = scmp.ne.s32.totalorder %s224, %s225
      %p237 = scmp.eq.s32.totalorder %s37, 1
      %p238 = por %p236, %p237
      %p240 = scmp.ne.s32.totalorder %s225, %s239
      %p241 = scmp.eq.s32.totalorder %s37, 0
      %p242 = por %p240, %p241
      %s244 = sadd.s32 %s243, 1
      %p247 = scmp.eq.s32.totalorder %s31, 1
      %p248 = scmp.ne.s32.totalorder %s243, %s245
      %p249 = scmp.eq.s32.totalorder %s31, 0
      %p250 = por %p248, %p249
      %p251 = scmp.ne.s32.totalorder %s243, %s245
      %p252 = scmp.eq.s32.totalorder %s36, 1
      %p253 = por %p251, %p252
      %p254 = scmp.ne.s32.totalorder %s245, %s246
      %p255 = scmp.eq.s32.totalorder %s36, 0
      %p256 = por %p254, %p255
      %p257 = scmp.ne.s32.totalorder %s245, %s246
      %p258 = scmp.eq.s32.totalorder %s37, 1
      %p259 = por %p257, %p258
      %p261 = scmp.ne.s32.totalorder %s246, %s260
      %p262 = scmp.eq.s32.totalorder %s37, 0
      %p263 = por %p261, %p262
      %s265 = sadd.s32 %s264, 1
      %p268 = scmp.eq.s32.totalorder %s31, 1
      %p269 = scmp.ne.s32.totalorder %s264, %s266
      %p270 = scmp.eq.s32.totalorder %s31, 0
      %p271 = por %p269, %p270
      %p272 = scmp.ne.s32.totalorder %s264, %s266
      %p273 = scmp.eq.s32.totalorder %s36, 1
      %p274 = por %p272, %p273
      %p275 = scmp.ne.s32.totalorder %s266, %s267
      %p276 = scmp.eq.s32.totalorder %s36, 0
      %p277 = por %p275, %p276
      %p278 = scmp.ne.s32.totalorder %s266, %s267
      %p279 = scmp.eq.s32.totalorder %s37, 1
      %p280 = por %p278, %p279
      %p282 = scmp.ne.s32.totalorder %s267, %s281
      %p283 = scmp.eq.s32.totalorder %s37, 0
      %p284 = por %p282, %p283
      %s286 = sadd.s32 %s285, 1
      %p289 = scmp.eq.s32.totalorder %s31, 1
      %p290 = scmp.ne.s32.totalorder %s285, %s287
      %p291 = scmp.eq.s32.totalorder %s31, 0
      %p292 = por %p290, %p291
      %p293 = scmp.ne.s32.totalorder %s285, %s287
      %p294 = scmp.eq.s32.totalorder %s36, 1
      %p295 = por %p293, %p294
      %p296 = scmp.ne.s32.totalorder %s287, %s288
      %p297 = scmp.eq.s32.totalorder %s36, 0
      %p298 = por %p296, %p297
      %p299 = scmp.ne.s32.totalorder %s287, %s288
      %p300 = scmp.eq.s32.totalorder %s37, 1
      %p301 = por %p299, %p300
      %p303 = scmp.ne.s32.totalorder %s288, %s302
      %p304 = scmp.eq.s32.totalorder %s37, 0
      %p305 = por %p303, %p304
      %s307 = sadd.s32 %s306, 1
      %p310 = scmp.eq.s32.totalorder %s31, 1
      %p311 = scmp.ne.s32.totalorder %s306, %s308
      %p312 = scmp.eq.s32.totalorder %s31, 0
      %p313 = por %p311, %p312
      %p314 = scmp.ne.s32.totalorder %s306, %s308
      %p315 = scmp.eq.s32.totalorder %s36, 1
      %p316 = por %p314, %p315
      %p317 = scmp.ne.s32.totalorder %s308, %s309
      %p318 = scmp.eq.s32.totalorder %s36, 0
      %p319 = por %p317, %p318
      %p320 = scmp.ne.s32.totalorder %s308, %s309
      %p321 = scmp.eq.s32.totalorder %s37, 1
      %p322 = por %p320, %p321
      %p324 = scmp.ne.s32.totalorder %s309, %s323
      %p325 = scmp.eq.s32.totalorder %s37, 0
      %p326 = por %p324, %p325
      %s327 = ssub.s32 %s31, %s38
      %p328 = scmp.eq.s32.totalorder %s327, 0
      %s330 = sadd.s32 %s329, 1
      %s331 = scalar_select %p328, %s329, %s330
      %p334 = pneg %p328
      %p335 = scmp.eq.s32.totalorder %s31, 1
      %p336 = por %p334, %p335
      %p337 = scmp.ne.s32.totalorder %s329, %s332
      %p338 = scmp.eq.s32.totalorder %s31, 0
      %p339 = por %p337, %p338
      %p340 = scmp.ne.s32.totalorder %s329, %s332
      %p341 = scmp.eq.s32.totalorder %s36, 1
      %p342 = por %p340, %p341
      %p343 = scmp.ne.s32.totalorder %s332, %s333
      %p344 = scmp.eq.s32.totalorder %s36, 0
      %p345 = por %p343, %p344
      %p346 = scmp.ne.s32.totalorder %s332, %s333
      %p347 = scmp.eq.s32.totalorder %s37, 1
      %p348 = por %p346, %p347
      %p350 = scmp.ne.s32.totalorder %s333, %s349
      %p351 = scmp.eq.s32.totalorder %s37, 0
      %p352 = por %p350, %p351
      %p353 = scmp.le.s32.totalorder 1, %s31
      %p354 = scmp.lt.s32.totalorder %s31, 3
      %p355 = pnand %p353, %p354
      %p356 = pneg %p355
      // Predicated region
      $region9: #{tpu_custom_call.1} parent=5 // pred_check
        _
      $region10: #{tpu_custom_call.1} parent=5 // pred_check_branch
        %358 = sbr.rel (%p355) target = $region12
      $region11: #{tpu_custom_call.1} parent=5 // pred_region
        %s359 = ssub.s32 %s31, 1
        // Predicated region
        $region13: #{tpu_custom_call.1} parent=11 // pred_check
          %p360 = pneg %p130
        $region14: #{tpu_custom_call.1} parent=11 // pred_check_branch
          %362 = sbr.rel (%p360) target = $region16
        $region15: #{tpu_custom_call.1} parent=11 // pred_region
          _
        $region16: #{tpu_custom_call.1} parent=11 // pred_fallthru
          _
        // Predicated region
        $region17: #{tpu_custom_call.1} parent=11 // pred_check
          %p363 = pneg %p151
        $region18: #{tpu_custom_call.1} parent=11 // pred_check_branch
          %365 = sbr.rel (%p363) target = $region20
        $region19: #{tpu_custom_call.1} parent=11 // pred_region
          %s367 = ssub.s32 128, 128
          %368 = vsyncadd [#allocation14], %s367
          %s370 = sshll.u32 [#allocation13], 4
          %s371 = int_to_ptr.vmem [resolvable:$true] %s370
          %373 = dma.hbm_to_vmem [thread:$0]  %s4, 128, %s371, [#allocation14]
        $region20: #{tpu_custom_call.1} parent=11 // pred_fallthru
          _
        // Predicated region
        $region21: #{tpu_custom_call.1} parent=11 // pred_check
          %p374 = pneg %p172
        $region22: #{tpu_custom_call.1} parent=11 // pred_check_branch
          %376 = sbr.rel (%p374) target = $region24
        $region23: #{tpu_custom_call.1} parent=11 // pred_region
          %s378 = ssub.s32 8192, 8192
          %379 = vsyncadd [#allocation14], %s378
          %s380 = sshll.u32 [#allocation15], 4
          %s381 = int_to_ptr.vmem [resolvable:$true] %s380
          %386 = dma.hbm_to_vmem [thread:$0]  %s5, 8192, %s381, [#allocation14], 256, 256, 16
        $region24: #{tpu_custom_call.1} parent=11 // pred_fallthru
          _
        // Predicated region
        $region25: #{tpu_custom_call.1} parent=11 // pred_check
          %p387 = pneg %p193
        $region26: #{tpu_custom_call.1} parent=11 // pred_check_branch
          %389 = sbr.rel (%p387) target = $region28
        $region27: #{tpu_custom_call.1} parent=11 // pred_region
          %s391 = ssub.s32 8192, 8192
          %392 = vsyncadd [#allocation17], %s391
          %s393 = sshll.u32 [#allocation16], 4
          %s394 = int_to_ptr.vmem [resolvable:$true] %s393
          %399 = dma.hbm_to_vmem [thread:$0]  %s6, 8192, %s394, [#allocation17], 256, 256, 16
        $region28: #{tpu_custom_call.1} parent=11 // pred_fallthru
          _
        // Predicated region
        $region29: #{tpu_custom_call.1} parent=11 // pred_check
          %p400 = pneg %p214
        $region30: #{tpu_custom_call.1} parent=11 // pred_check_branch
          %402 = sbr.rel (%p400) target = $region32
        $region31: #{tpu_custom_call.1} parent=11 // pred_region
          %s404 = ssub.s32 8192, 8192
          %405 = vsyncadd [#allocation17], %s404
          %s406 = sshll.u32 [#allocation18], 4
          %s407 = int_to_ptr.vmem [resolvable:$true] %s406
          %412 = dma.hbm_to_vmem [thread:$0]  %s7, 8192, %s407, [#allocation17], 256, 256, 16
        $region32: #{tpu_custom_call.1} parent=11 // pred_fallthru
          _
        // Predicated region
        $region33: #{tpu_custom_call.1} parent=11 // pred_check
          %p413 = pneg %p235
        $region34: #{tpu_custom_call.1} parent=11 // pred_check_branch
          %415 = sbr.rel (%p413) target = $region36
        $region35: #{tpu_custom_call.1} parent=11 // pred_region
          _
        $region36: #{tpu_custom_call.1} parent=11 // pred_fallthru
          _
        // Predicated region
        $region37: #{tpu_custom_call.1} parent=11 // pred_check
          %p416 = pneg %p256
        $region38: #{tpu_custom_call.1} parent=11 // pred_check_branch
          %418 = sbr.rel (%p416) target = $region40
        $region39: #{tpu_custom_call.1} parent=11 // pred_region
          _
        $region40: #{tpu_custom_call.1} parent=11 // pred_fallthru
          _
        // Predicated region
        $region41: #{tpu_custom_call.1} parent=11 // pred_check
          %p419 = pneg %p277
        $region42: #{tpu_custom_call.1} parent=11 // pred_check_branch
          %421 = sbr.rel (%p419) target = $region44
        $region43: #{tpu_custom_call.1} parent=11 // pred_region
          _
        $region44: #{tpu_custom_call.1} parent=11 // pred_fallthru
          _
        // Predicated region
        $region45: #{tpu_custom_call.1} parent=11 // pred_check
          %p422 = pneg %p298
        $region46: #{tpu_custom_call.1} parent=11 // pred_check_branch
          %424 = sbr.rel (%p422) target = $region48
        $region47: #{tpu_custom_call.1} parent=11 // pred_region
          %s426 = ssub.s32 8192, 8192
          %427 = vsyncadd [#allocation20], %s426
          %s428 = sshll.u32 [#allocation19], 4
          %s429 = int_to_ptr.vmem [resolvable:$true] %s428
          %434 = dma.hbm_to_vmem [thread:$0]  %s11, 8192, %s429, [#allocation20], 256, 256, 16
        $region48: #{tpu_custom_call.1} parent=11 // pred_fallthru
          _
        // Predicated region
        $region49: #{tpu_custom_call.1} parent=11 // pred_check
          %p435 = pneg %p319
        $region50: #{tpu_custom_call.1} parent=11 // pred_check_branch
          %437 = sbr.rel (%p435) target = $region52
        $region51: #{tpu_custom_call.1} parent=11 // pred_region
          _
        $region52: #{tpu_custom_call.1} parent=11 // pred_fallthru
          _
      $region12: #{tpu_custom_call.1} parent=5 // pred_fallthru
        _
      %p438 = scmp.lt.s32.totalorder %s31, 2
      // Predicated region
      $region53: #{tpu_custom_call.1} parent=5 // pred_check
        %p439 = pneg %p438
      $region54: #{tpu_custom_call.1} parent=5 // pred_check_branch
        %441 = sbr.rel (%p439) target = $region56
      $region55: #{tpu_custom_call.1} parent=5 // pred_region
        // Predicated region
        $region57: #{tpu_custom_call.1} parent=55 // pred_check
          %p442 = pneg %p51
        $region58: #{tpu_custom_call.1} parent=55 // pred_check_branch
          %444 = sbr.rel (%p442) target = $region60
        $region59: #{tpu_custom_call.1} parent=55 // pred_region
          %s445 = sand.u32 %s41, 1
          %s446 = scalar_lea.sflag [#allocation8], %s445
          %s447 = sand.u32 %s41, 1
          %s448 = smul.addr %s447, 16
          %s449 = scalar_lea.vmem [#allocation7], %s448
          %s451 = ssub.s32 256, 256
          %452 = vsyncadd %s446, %s451
          %s453 = smul.addr %s31, 2
          %s454 = smul.addr %s453, 128
          %s455 = scalar_lea.hbm %s0, %s454
          %s457 = sshll.u32 %s449, 4
          %s458 = int_to_ptr.vmem [resolvable:$true] %s457
          %460 = dma.hbm_to_vmem [thread:$0]  %s455, 256, %s458, %s446
        $region60: #{tpu_custom_call.1} parent=55 // pred_fallthru
          _
        // Predicated region
        $region61: #{tpu_custom_call.1} parent=55 // pred_check
          %p461 = pneg %p77
        $region62: #{tpu_custom_call.1} parent=55 // pred_check_branch
          %463 = sbr.rel (%p461) target = $region64
        $region63: #{tpu_custom_call.1} parent=55 // pred_region
          %s464 = sand.u32 %s31, 1
          %s465 = scalar_lea.sflag [#allocation11], %s464
          %s466 = sand.u32 %s67, 1
          %s467 = smul.addr %s466, 16
          %s468 = scalar_lea.vmem [#allocation10], %s467
          %s470 = ssub.s32 256, 256
          %471 = vsyncadd %s465, %s470
          %s472 = smul.addr %s31, 2
          %s473 = smul.addr %s472, 128
          %s474 = scalar_lea.hbm %s1, %s473
          %s476 = sshll.u32 %s468, 4
          %s477 = int_to_ptr.vmem [resolvable:$true] %s476
          %479 = dma.hbm_to_vmem [thread:$0]  %s474, 256, %s477, %s465
        $region64: #{tpu_custom_call.1} parent=55 // pred_fallthru
          _
        // Predicated region
        $region65: #{tpu_custom_call.1} parent=55 // pred_check
          %p480 = pneg %p103
        $region66: #{tpu_custom_call.1} parent=55 // pred_check_branch
          %482 = sbr.rel (%p480) target = $region68
        $region67: #{tpu_custom_call.1} parent=55 // pred_region
          %s483 = sand.u32 %s31, 1
          %s484 = scalar_lea.sflag [#allocation11], %s483
          %s485 = sand.u32 %s93, 1
          %s486 = smul.addr %s485, 16
          %s487 = scalar_lea.vmem [#allocation12], %s486
          %s489 = ssub.s32 256, 256
          %490 = vsyncadd %s484, %s489
          %s491 = smul.addr %s31, 2
          %s492 = smul.addr %s491, 128
          %s493 = scalar_lea.hbm %s2, %s492
          %s495 = sshll.u32 %s487, 4
          %s496 = int_to_ptr.vmem [resolvable:$true] %s495
          %498 = dma.hbm_to_vmem [thread:$0]  %s493, 256, %s496, %s484
        $region68: #{tpu_custom_call.1} parent=55 // pred_fallthru
          _
      $region56: #{tpu_custom_call.1} parent=5 // pred_fallthru
        _
      %p499 = scmp.le.s32.totalorder 1, %s31
      %p500 = scmp.lt.s32.totalorder %s31, 3
      %p501 = pnand %p499, %p500
      %p502 = pneg %p501
      // Predicated region
      $region69: #{tpu_custom_call.1} parent=5 // pred_check
        _
      $region70: #{tpu_custom_call.1} parent=5 // pred_check_branch
        %504 = sbr.rel (%p501) target = $region72
      $region71: #{tpu_custom_call.1} parent=5 // pred_region
        %s505 = ssub.s32 %s31, 1
        %s506 = sand.u32 %s44, 1
        %s507 = scalar_lea.sflag [#allocation8], %s506
        %s508 = sand.u32 %s44, 1
        %s509 = smul.addr %s508, 16
        %s510 = scalar_lea.vmem [#allocation7], %s509
        // Predicated region
        $region73: #{tpu_custom_call.1} parent=71 // pred_check
          %p511 = pneg %p57
        $region74: #{tpu_custom_call.1} parent=71 // pred_check_branch
          %513 = sbr.rel (%p511) target = $region76
        $region75: #{tpu_custom_call.1} parent=71 // pred_region
          %514 = dma.done %s507, 256
        $region76: #{tpu_custom_call.1} parent=71 // pred_fallthru
          _
        %s515 = sand.u32 %s36, 1
        %s516 = scalar_lea.sflag [#allocation11], %s515
        %s517 = sand.u32 %s70, 1
        %s518 = smul.addr %s517, 16
        %s519 = scalar_lea.vmem [#allocation10], %s518
        // Predicated region
        $region77: #{tpu_custom_call.1} parent=71 // pred_check
          %p520 = pneg %p83
        $region78: #{tpu_custom_call.1} parent=71 // pred_check_branch
          %522 = sbr.rel (%p520) target = $region80
        $region79: #{tpu_custom_call.1} parent=71 // pred_region
          %523 = dma.done %s516, 256
        $region80: #{tpu_custom_call.1} parent=71 // pred_fallthru
          _
        %s524 = sand.u32 %s36, 1
        %s525 = scalar_lea.sflag [#allocation11], %s524
        %s526 = sand.u32 %s96, 1
        %s527 = smul.addr %s526, 16
        %s528 = scalar_lea.vmem [#allocation12], %s527
        // Predicated region
        $region81: #{tpu_custom_call.1} parent=71 // pred_check
          %p529 = pneg %p109
        $region82: #{tpu_custom_call.1} parent=71 // pred_check_branch
          %531 = sbr.rel (%p529) target = $region84
        $region83: #{tpu_custom_call.1} parent=71 // pred_region
          %532 = dma.done %s525, 256
        $region84: #{tpu_custom_call.1} parent=71 // pred_fallthru
          _
        // Predicated region
        $region85: #{tpu_custom_call.1} parent=71 // pred_check
          %p533 = pneg %p151
        $region86: #{tpu_custom_call.1} parent=71 // pred_check_branch
          %535 = sbr.rel (%p533) target = $region88
        $region87: #{tpu_custom_call.1} parent=71 // pred_region
          %536 = dma.done [#allocation14], 128
        $region88: #{tpu_custom_call.1} parent=71 // pred_fallthru
          _
        // Predicated region
        $region89: #{tpu_custom_call.1} parent=71 // pred_check
          %p537 = pneg %p172
        $region90: #{tpu_custom_call.1} parent=71 // pred_check_branch
          %539 = sbr.rel (%p537) target = $region92
        $region91: #{tpu_custom_call.1} parent=71 // pred_region
          %540 = dma.done [#allocation14], 8192
        $region92: #{tpu_custom_call.1} parent=71 // pred_fallthru
          _
        // Predicated region
        $region93: #{tpu_custom_call.1} parent=71 // pred_check
          %p541 = pneg %p193
        $region94: #{tpu_custom_call.1} parent=71 // pred_check_branch
          %543 = sbr.rel (%p541) target = $region96
        $region95: #{tpu_custom_call.1} parent=71 // pred_region
          %544 = dma.done [#allocation17], 8192
        $region96: #{tpu_custom_call.1} parent=71 // pred_fallthru
          _
        // Predicated region
        $region97: #{tpu_custom_call.1} parent=71 // pred_check
          %p545 = pneg %p214
        $region98: #{tpu_custom_call.1} parent=71 // pred_check_branch
          %547 = sbr.rel (%p545) target = $region100
        $region99: #{tpu_custom_call.1} parent=71 // pred_region
          %548 = dma.done [#allocation17], 8192
        $region100: #{tpu_custom_call.1} parent=71 // pred_fallthru
          _
        // Predicated region
        $region101: #{tpu_custom_call.1} parent=71 // pred_check
          %p549 = pneg %p298
        $region102: #{tpu_custom_call.1} parent=71 // pred_check_branch
          %551 = sbr.rel (%p549) target = $region104
        $region103: #{tpu_custom_call.1} parent=71 // pred_region
          %552 = dma.done [#allocation20], 8192
        $region104: #{tpu_custom_call.1} parent=71 // pred_fallthru
          _
        %s553 = sand.u32 %s44, 1
        %s554 = scalar_lea.sflag [#allocation8], %s553
        %s555 = sand.u32 %s44, 1
        %s556 = smul.addr %s555, 16
        %s557 = scalar_lea.vmem [#allocation7], %s556
        %p558 = pneg %p57
        %p559 = pneg %p54
        %s560 = sand.u32 %s36, 1
        %s561 = scalar_lea.sflag [#allocation11], %s560
        %s562 = sand.u32 %s70, 1
        %s563 = smul.addr %s562, 16
        %s564 = scalar_lea.vmem [#allocation10], %s563
        %p565 = pneg %p83
        %p566 = pneg %p80
        %s567 = sand.u32 %s36, 1
        %s568 = scalar_lea.sflag [#allocation11], %s567
        %s569 = sand.u32 %s96, 1
        %s570 = smul.addr %s569, 16
        %s571 = scalar_lea.vmem [#allocation12], %s570
        %p572 = pneg %p109
        %p573 = pneg %p106
        %p574 = pneg %p130
        %p575 = pneg %p127
        %p576 = pneg %p151
        %p577 = pneg %p148
        %p578 = pneg %p172
        %p579 = pneg %p169
        %p580 = pneg %p193
        %p581 = pneg %p190
        %p582 = pneg %p214
        %p583 = pneg %p211
        %p584 = pneg %p235
        %p585 = pneg %p232
        %p586 = pneg %p256
        %p587 = pneg %p253
        %p588 = pneg %p277
        %p589 = pneg %p274
        %p590 = pneg %p298
        %p591 = pneg %p295
        %p592 = pneg %p319
        %p593 = pneg %p316
        %p594 = pneg %p345
        %p595 = pneg %p342
        %s596 = sand.u32 %s332, 1
        %s597 = scalar_lea.sflag [#allocation9], %s596
        %s598 = sand.u32 %s332, 1
        %s599 = smul.addr %s598, 16
        %s600 = scalar_lea.vmem [#allocation21], %s599
        %v601 = vld [vmem:[%s3] sm:$0x77]
        %v602 = vld [vmem:[#allocation13] sm:$0x77]
        %v603 = vld [vmem:[%s510] sm:$0xff]
        %v604 = vld [vmem:[%s510 + $0x8] sm:$0xff]
        %v605 = vadd.f32 %v603, %v604
        %606 = vadd.xlane.f32.xlu0 %v605
        %v607 = vpop.xlane.xlu0 %606
        %v608 = vrcp.pop 256.0
        %v609 = vmul.f32 %v607, %v608
        %v610 = vsub.f32 %v603, %v609
        %v611 = vsub.f32 %v604, %v609
        %v612 = vmul.f32 %v610, %v610
        %v613 = vmul.f32 %v611, %v611
        %v614 = vadd.f32 %v612, %v613
        %615 = vadd.xlane.f32.xlu0 %v614
        %v616 = vpop.xlane.xlu0 %615
        %v617 = vmul.f32 %v616, %v608
        %v618 = vadd.f32 %v617, 1e-05
        %v619 = vrsqrt.pop %v618
        %v620 = vmul.f32 %v610, %v619
        %v621 = vmul.f32 %v611, %v619
        %v623 = vlaneseq
        %v624 = vshrl.u32 %v623, 7
        %v625 = vsub.s32 0, %v624
        %v626 = vrot.slane %v601, %v625
        %v627 = vlaneseq
        %v628 = vshrl.u32 %v627, 7
        %v629 = vsub.s32 4, %v628
        %v630 = vrot.slane %v601, %v629
        %v633 = vlaneseq
        %v634 = vshrl.u32 %v633, 7
        %v635 = vsub.s32 0, %v634
        %v636 = vrot.slane %v626, %v635
        %v637 = vlaneseq
        %v638 = vshrl.u32 %v637, 7
        %v639 = vsub.s32 0, %v638
        %v640 = vrot.slane %v630, %v639
        %v641 = vmul.f32 %v620, %v636
        %v642 = vmul.f32 %v621, %v640
        %v644 = vlaneseq
        %v645 = vshrl.u32 %v644, 7
        %v646 = vsub.s32 0, %v645
        %v647 = vrot.slane %v602, %v646
        %v648 = vlaneseq
        %v649 = vshrl.u32 %v648, 7
        %v650 = vsub.s32 4, %v649
        %v651 = vrot.slane %v602, %v650
        %v654 = vlaneseq
        %v655 = vshrl.u32 %v654, 7
        %v656 = vsub.s32 0, %v655
        %v657 = vrot.slane %v647, %v656
        %v658 = vlaneseq
        %v659 = vshrl.u32 %v658, 7
        %v660 = vsub.s32 0, %v659
        %v661 = vrot.slane %v651, %v660
        %v662 = vadd.f32 %v641, %v657
        %v663 = vadd.f32 %v642, %v661
        %v664 = vld [vmem:[%s519] sm:$0xff]
        %v665 = vld [vmem:[%s519 + $0x8] sm:$0xff]
        %v666 = vadd.f32 %v664, %v665
        %667 = vadd.xlane.f32.xlu0 %v666
        %v668 = vpop.xlane.xlu0 %667
        %v669 = vmul.f32 %v668, %v608
        %v670 = vsub.f32 %v664, %v669
        %v671 = vsub.f32 %v665, %v669
        %v672 = vmul.f32 %v670, %v670
        %v673 = vmul.f32 %v671, %v671
        %v674 = vadd.f32 %v672, %v673
        %675 = vadd.xlane.f32.xlu0 %v674
        %v676 = vpop.xlane.xlu0 %675
        %v677 = vmul.f32 %v676, %v608
        %v678 = vadd.f32 %v677, 1e-05
        %v679 = vrsqrt.pop %v678
        %v680 = vmul.f32 %v670, %v679
        %v681 = vmul.f32 %v671, %v679
        %v682 = vlaneseq
        %v683 = vshrl.u32 %v682, 7
        %v684 = vsub.s32 1, %v683
        %v685 = vrot.slane %v601, %v684
        %v686 = vlaneseq
        %v687 = vshrl.u32 %v686, 7
        %v688 = vsub.s32 5, %v687
        %v689 = vrot.slane %v601, %v688
        %v692 = vlaneseq
        %v693 = vshrl.u32 %v692, 7
        %v694 = vsub.s32 1, %v693
        %v695 = vrot.slane %v685, %v694
        %v696 = vlaneseq
        %v697 = vshrl.u32 %v696, 7
        %v698 = vsub.s32 1, %v697
        %v699 = vrot.slane %v689, %v698
        %v700 = vmul.f32 %v680, %v695
        %v701 = vmul.f32 %v681, %v699
        %v702 = vlaneseq
        %v703 = vshrl.u32 %v702, 7
        %v704 = vsub.s32 1, %v703
        %v705 = vrot.slane %v602, %v704
        %v706 = vlaneseq
        %v707 = vshrl.u32 %v706, 7
        %v708 = vsub.s32 5, %v707
        %v709 = vrot.slane %v602, %v708
        %v712 = vlaneseq
        %v713 = vshrl.u32 %v712, 7
        %v714 = vsub.s32 1, %v713
        %v715 = vrot.slane %v705, %v714
        %v716 = vlaneseq
        %v717 = vshrl.u32 %v716, 7
        %v718 = vsub.s32 1, %v717
        %v719 = vrot.slane %v709, %v718
        %v720 = vadd.f32 %v700, %v715
        %v721 = vadd.f32 %v701, %v719
        %v722 = vld [vmem:[%s528] sm:$0xff]
        %v723 = vld [vmem:[%s528 + $0x8] sm:$0xff]
        %v724 = vadd.f32 %v722, %v723
        %725 = vadd.xlane.f32.xlu0 %v724
        %v726 = vpop.xlane.xlu0 %725
        %v727 = vmul.f32 %v726, %v608
        %v728 = vsub.f32 %v722, %v727
        %v729 = vsub.f32 %v723, %v727
        %v730 = vmul.f32 %v728, %v728
        %v731 = vmul.f32 %v729, %v729
        %v732 = vadd.f32 %v730, %v731
        %733 = vadd.xlane.f32.xlu0 %v732
        %v734 = vpop.xlane.xlu0 %733
        %v735 = vmul.f32 %v734, %v608
        %v736 = vadd.f32 %v735, 1e-05
        %v737 = vrsqrt.pop %v736
        %v738 = vmul.f32 %v728, %v737
        %v739 = vmul.f32 %v729, %v737
        %v740 = vlaneseq
        %v741 = vshrl.u32 %v740, 7
        %v742 = vsub.s32 2, %v741
        %v743 = vrot.slane %v601, %v742
        %v744 = vlaneseq
        %v745 = vshrl.u32 %v744, 7
        %v746 = vsub.s32 6, %v745
        %v747 = vrot.slane %v601, %v746
        %v750 = vlaneseq
        %v751 = vshrl.u32 %v750, 7
        %v752 = vsub.s32 2, %v751
        %v753 = vrot.slane %v743, %v752
        %v754 = vlaneseq
        %v755 = vshrl.u32 %v754, 7
        %v756 = vsub.s32 2, %v755
        %v757 = vrot.slane %v747, %v756
        %v758 = vmul.f32 %v738, %v753
        %v759 = vmul.f32 %v739, %v757
        %v760 = vlaneseq
        %v761 = vshrl.u32 %v760, 7
        %v762 = vsub.s32 2, %v761
        %v763 = vrot.slane %v602, %v762
        %v764 = vlaneseq
        %v765 = vshrl.u32 %v764, 7
        %v766 = vsub.s32 6, %v765
        %v767 = vrot.slane %v602, %v766
        %v770 = vlaneseq
        %v771 = vshrl.u32 %v770, 7
        %v772 = vsub.s32 2, %v771
        %v773 = vrot.slane %v763, %v772
        %v774 = vlaneseq
        %v775 = vshrl.u32 %v774, 7
        %v776 = vsub.s32 2, %v775
        %v777 = vrot.slane %v767, %v776
        %v778 = vadd.f32 %v758, %v773
        %v779 = vadd.f32 %v759, %v777
        %780 = vst [vmem:[#allocation2] sm:$0xff] %v662
        %781 = vst [vmem:[#allocation2 + $0x8] sm:$0xff] %v663
        %782 = vst [vmem:[#allocation2 + $0x10] sm:$0xff] %v720
        %783 = vst [vmem:[#allocation2 + $0x18] sm:$0xff] %v721
        %784 = vst [vmem:[#allocation2 + $0x20] sm:$0xff] %v778
        %785 = vst [vmem:[#allocation2 + $0x28] sm:$0xff] %v779
        %v786 = vld [vmem:[#allocation2] sm:$0xff]
        %v787 = vld [vmem:[#allocation2 + $0x8] sm:$0xff]
        %v788 = vld [vmem:[#allocation2 + $0x10] sm:$0xff]
        %v789 = vld [vmem:[#allocation2 + $0x18] sm:$0xff]
        %v790 = vld [vmem:[#allocation2 + $0x20] sm:$0xff]
        %v791 = vld [vmem:[#allocation2 + $0x28] sm:$0xff]
        %v792 = vld [vmem:[#allocation15] sm:$0xff]
        %v793 = vld [vmem:[#allocation15 + $0x8] sm:$0xff]
        %v794 = vld [vmem:[#allocation15 + $0x10] sm:$0xff]
        %v795 = vld [vmem:[#allocation15 + $0x18] sm:$0xff]
        %v796 = vld [vmem:[#allocation15 + $0x20] sm:$0xff]
        %v797 = vld [vmem:[#allocation15 + $0x28] sm:$0xff]
        %v798 = vld [vmem:[#allocation15 + $0x30] sm:$0xff]
        %v799 = vld [vmem:[#allocation15 + $0x38] sm:$0xff]
        %v800 = vld [vmem:[#allocation15 + $0x40] sm:$0xff]
        %v801 = vld [vmem:[#allocation15 + $0x48] sm:$0xff]
        %v802 = vld [vmem:[#allocation15 + $0x50] sm:$0xff]
        %v803 = vld [vmem:[#allocation15 + $0x58] sm:$0xff]
        %v804 = vld [vmem:[#allocation15 + $0x60] sm:$0xff]
        %v805 = vld [vmem:[#allocation15 + $0x68] sm:$0xff]
        %v806 = vld [vmem:[#allocation15 + $0x70] sm:$0xff]
        %v807 = vld [vmem:[#allocation15 + $0x78] sm:$0xff]
        %v808 = vld [vmem:[#allocation15 + $0x80] sm:$0xff]
        %v809 = vld [vmem:[#allocation15 + $0x88] sm:$0xff]
        %v810 = vld [vmem:[#allocation15 + $0x90] sm:$0xff]
        %v811 = vld [vmem:[#allocation15 + $0x98] sm:$0xff]
        %v812 = vld [vmem:[#allocation15 + $0xa0] sm:$0xff]
        %v813 = vld [vmem:[#allocation15 + $0xa8] sm:$0xff]
        %v814 = vld [vmem:[#allocation15 + $0xb0] sm:$0xff]
        %v815 = vld [vmem:[#allocation15 + $0xb8] sm:$0xff]
        %v816 = vld [vmem:[#allocation15 + $0xc0] sm:$0xff]
        %v817 = vld [vmem:[#allocation15 + $0xc8] sm:$0xff]
        %v818 = vld [vmem:[#allocation15 + $0xd0] sm:$0xff]
        %v819 = vld [vmem:[#allocation15 + $0xd8] sm:$0xff]
        %v820 = vld [vmem:[#allocation15 + $0xe0] sm:$0xff]
        %v821 = vld [vmem:[#allocation15 + $0xe8] sm:$0xff]
        %v822 = vld [vmem:[#allocation15 + $0xf0] sm:$0xff]
        %v823 = vld [vmem:[#allocation15 + $0xf8] sm:$0xff]
        %v824 = vld [vmem:[#allocation15 + $0x100] sm:$0xff]
        %v825 = vld [vmem:[#allocation15 + $0x108] sm:$0xff]
        %v826 = vld [vmem:[#allocation15 + $0x110] sm:$0xff]
        %v827 = vld [vmem:[#allocation15 + $0x118] sm:$0xff]
        %v828 = vld [vmem:[#allocation15 + $0x120] sm:$0xff]
        %v829 = vld [vmem:[#allocation15 + $0x128] sm:$0xff]
        %v830 = vld [vmem:[#allocation15 + $0x130] sm:$0xff]
        %v831 = vld [vmem:[#allocation15 + $0x138] sm:$0xff]
        %v832 = vld [vmem:[#allocation15 + $0x140] sm:$0xff]
        %v833 = vld [vmem:[#allocation15 + $0x148] sm:$0xff]
        %v834 = vld [vmem:[#allocation15 + $0x150] sm:$0xff]
        %v835 = vld [vmem:[#allocation15 + $0x158] sm:$0xff]
        %v836 = vld [vmem:[#allocation15 + $0x160] sm:$0xff]
        %v837 = vld [vmem:[#allocation15 + $0x168] sm:$0xff]
        %v838 = vld [vmem:[#allocation15 + $0x170] sm:$0xff]
        %v839 = vld [vmem:[#allocation15 + $0x178] sm:$0xff]
        %v840 = vld [vmem:[#allocation15 + $0x180] sm:$0xff]
        %v841 = vld [vmem:[#allocation15 + $0x188] sm:$0xff]
        %v842 = vld [vmem:[#allocation15 + $0x190] sm:$0xff]
        %v843 = vld [vmem:[#allocation15 + $0x198] sm:$0xff]
        %v844 = vld [vmem:[#allocation15 + $0x1a0] sm:$0xff]
        %v845 = vld [vmem:[#allocation15 + $0x1a8] sm:$0xff]
        %v846 = vld [vmem:[#allocation15 + $0x1b0] sm:$0xff]
        %v847 = vld [vmem:[#allocation15 + $0x1b8] sm:$0xff]
        %v848 = vld [vmem:[#allocation15 + $0x1c0] sm:$0xff]
        %v849 = vld [vmem:[#allocation15 + $0x1c8] sm:$0xff]
        %v850 = vld [vmem:[#allocation15 + $0x1d0] sm:$0xff]
        %v851 = vld [vmem:[#allocation15 + $0x1d8] sm:$0xff]
        %v852 = vld [vmem:[#allocation15 + $0x1e0] sm:$0xff]
        %v853 = vld [vmem:[#allocation15 + $0x1e8] sm:$0xff]
        %v854 = vld [vmem:[#allocation15 + $0x1f0] sm:$0xff]
        %v855 = vld [vmem:[#allocation15 + $0x1f8] sm:$0xff]
        %v856 = vld [vmem:[%s8] sm:$0x3]
        %v858 = vlaneseq
        %v859 = vshrl.u32 %v858, 7
        %v860 = vsub.s32 0, %v859
        %v861 = vrot.slane %v856, %v860
        %v862 = vlaneseq
        %v863 = vshrl.u32 %v862, 7
        %v864 = vsub.s32 1, %v863
        %v865 = vrot.slane %v856, %v864
        %868 = vmatprep.subr.mxu0 %v793
        %869 = vmatpush1.msra.mxu0 %v792
        %870 = vmatprep.subr.mxu0 %v795
        %871 = vmatpush1.msra.mxu0 %v794
        %872 = vmatprep.subr.mxu0 %v797
        %873 = vmatpush1.msra.mxu0 %v796
        %874 = vmatprep.subr.mxu0 %v799
        %875 = vmatpush1.msra.mxu0 %v798
        %876 = vmatprep.subr.mxu0 %v801
        %877 = vmatpush1.msra.mxu0 %v800
        %878 = vmatprep.subr.mxu0 %v803
        %879 = vmatpush1.msra.mxu0 %v802
        %880 = vmatprep.subr.mxu0 %v805
        %881 = vmatpush1.msra.mxu0 %v804
        %882 = vmatprep.subr.mxu0 %v807
        %883 = vmatpush1.msra.mxu0 %v806
        %884 = vmatprep.subr.mxu0 %v809
        %885 = vmatpush1.msra.mxu0 %v808
        %886 = vmatprep.subr.mxu0 %v811
        %887 = vmatpush1.msra.mxu0 %v810
        %888 = vmatprep.subr.mxu0 %v813
        %889 = vmatpush1.msra.mxu0 %v812
        %890 = vmatprep.subr.mxu0 %v815
        %891 = vmatpush1.msra.mxu0 %v814
        %892 = vmatprep.subr.mxu0 %v817
        %893 = vmatpush1.msra.mxu0 %v816
        %894 = vmatprep.subr.mxu0 %v819
        %895 = vmatpush1.msra.mxu0 %v818
        %896 = vmatprep.subr.mxu0 %v821
        %897 = vmatpush1.msra.mxu0 %v820
        %898 = vmatprep.subr.mxu0 %v823
        %899 = vmatpush1.msra.mxu0 %v822
        %900 = vmatprep.subr.mxu0 %v825
        %901 = vmatpush1.msra.mxu0 %v824
        %902 = vmatprep.subr.mxu0 %v827
        %903 = vmatpush1.msra.mxu0 %v826
        %904 = vmatprep.subr.mxu0 %v829
        %905 = vmatpush1.msra.mxu0 %v828
        %906 = vmatprep.subr.mxu0 %v831
        %907 = vmatpush1.msra.mxu0 %v830
        %908 = vmatprep.subr.mxu0 %v833
        %909 = vmatpush1.msra.mxu0 %v832
        %910 = vmatprep.subr.mxu0 %v835
        %911 = vmatpush1.msra.mxu0 %v834
        %912 = vmatprep.subr.mxu0 %v837
        %913 = vmatpush1.msra.mxu0 %v836
        %914 = vmatprep.subr.mxu0 %v839
        %915 = vmatpush1.msra.mxu0 %v838
        %916 = vmatprep.subr.mxu0 %v841
        %917 = vmatpush1.msra.mxu0 %v840
        %918 = vmatprep.subr.mxu0 %v843
        %919 = vmatpush1.msra.mxu0 %v842
        %920 = vmatprep.subr.mxu0 %v845
        %921 = vmatpush1.msra.mxu0 %v844
        %922 = vmatprep.subr.mxu0 %v847
        %923 = vmatpush1.msra.mxu0 %v846
        %924 = vmatprep.subr.mxu0 %v849
        %925 = vmatpush1.msra.mxu0 %v848
        %926 = vmatprep.subr.mxu0 %v851
        %927 = vmatpush1.msra.mxu0 %v850
        %928 = vmatprep.subr.mxu0 %v853
        %929 = vmatpush1.msra.mxu0 %v852
        %930 = vmatprep.subr.mxu0 %v855
        %931 = vmatpush1.msra.mxu0 %v854
        %932 = vmatprep.mubr.f32.mxu0 %v779
        %933 = vmatmul.mubr.f32.gmra.mrb[0].mxu0 %v778
        %v934 = vpop.f32.mrb[0].mxu0
        %v935 = vadd.f32 %v861, %v934
        %v936 = vpop.f32.mrb[0].mxu0
        %v937 = vadd.f32 %v865, %v936
        %938 = vdwg.mxu0
        %v939 = vld [vmem:[#allocation16] sm:$0xff]
        %v940 = vld [vmem:[#allocation16 + $0x8] sm:$0xff]
        %v941 = vld [vmem:[#allocation16 + $0x10] sm:$0xff]
        %v942 = vld [vmem:[#allocation16 + $0x18] sm:$0xff]
        %v943 = vld [vmem:[#allocation16 + $0x20] sm:$0xff]
        %v944 = vld [vmem:[#allocation16 + $0x28] sm:$0xff]
        %v945 = vld [vmem:[#allocation16 + $0x30] sm:$0xff]
        %v946 = vld [vmem:[#allocation16 + $0x38] sm:$0xff]
        %v947 = vld [vmem:[#allocation16 + $0x40] sm:$0xff]
        %v948 = vld [vmem:[#allocation16 + $0x48] sm:$0xff]
        %v949 = vld [vmem:[#allocation16 + $0x50] sm:$0xff]
        %v950 = vld [vmem:[#allocation16 + $0x58] sm:$0xff]
        %v951 = vld [vmem:[#allocation16 + $0x60] sm:$0xff]
        %v952 = vld [vmem:[#allocation16 + $0x68] sm:$0xff]
        %v953 = vld [vmem:[#allocation16 + $0x70] sm:$0xff]
        %v954 = vld [vmem:[#allocation16 + $0x78] sm:$0xff]
        %v955 = vld [vmem:[#allocation16 + $0x80] sm:$0xff]
        %v956 = vld [vmem:[#allocation16 + $0x88] sm:$0xff]
        %v957 = vld [vmem:[#allocation16 + $0x90] sm:$0xff]
        %v958 = vld [vmem:[#allocation16 + $0x98] sm:$0xff]
        %v959 = vld [vmem:[#allocation16 + $0xa0] sm:$0xff]
        %v960 = vld [vmem:[#allocation16 + $0xa8] sm:$0xff]
        %v961 = vld [vmem:[#allocation16 + $0xb0] sm:$0xff]
        %v962 = vld [vmem:[#allocation16 + $0xb8] sm:$0xff]
        %v963 = vld [vmem:[#allocation16 + $0xc0] sm:$0xff]
        %v964 = vld [vmem:[#allocation16 + $0xc8] sm:$0xff]
        %v965 = vld [vmem:[#allocation16 + $0xd0] sm:$0xff]
        %v966 = vld [vmem:[#allocation16 + $0xd8] sm:$0xff]
        %v967 = vld [vmem:[#allocation16 + $0xe0] sm:$0xff]
        %v968 = vld [vmem:[#allocation16 + $0xe8] sm:$0xff]
        %v969 = vld [vmem:[#allocation16 + $0xf0] sm:$0xff]
        %v970 = vld [vmem:[#allocation16 + $0xf8] sm:$0xff]
        %v971 = vld [vmem:[#allocation16 + $0x100] sm:$0xff]
        %v972 = vld [vmem:[#allocation16 + $0x108] sm:$0xff]
        %v973 = vld [vmem:[#allocation16 + $0x110] sm:$0xff]
        %v974 = vld [vmem:[#allocation16 + $0x118] sm:$0xff]
        %v975 = vld [vmem:[#allocation16 + $0x120] sm:$0xff]
        %v976 = vld [vmem:[#allocation16 + $0x128] sm:$0xff]
        %v977 = vld [vmem:[#allocation16 + $0x130] sm:$0xff]
        %v978 = vld [vmem:[#allocation16 + $0x138] sm:$0xff]
        %v979 = vld [vmem:[#allocation16 + $0x140] sm:$0xff]
        %v980 = vld [vmem:[#allocation16 + $0x148] sm:$0xff]
        %v981 = vld [vmem:[#allocation16 + $0x150] sm:$0xff]
        %v982 = vld [vmem:[#allocation16 + $0x158] sm:$0xff]
        %v983 = vld [vmem:[#allocation16 + $0x160] sm:$0xff]
        %v984 = vld [vmem:[#allocation16 + $0x168] sm:$0xff]
        %v985 = vld [vmem:[#allocation16 + $0x170] sm:$0xff]
        %v986 = vld [vmem:[#allocation16 + $0x178] sm:$0xff]
        %v987 = vld [vmem:[#allocation16 + $0x180] sm:$0xff]
        %v988 = vld [vmem:[#allocation16 + $0x188] sm:$0xff]
        %v989 = vld [vmem:[#allocation16 + $0x190] sm:$0xff]
        %v990 = vld [vmem:[#allocation16 + $0x198] sm:$0xff]
        %v991 = vld [vmem:[#allocation16 + $0x1a0] sm:$0xff]
        %v992 = vld [vmem:[#allocation16 + $0x1a8] sm:$0xff]
        %v993 = vld [vmem:[#allocation16 + $0x1b0] sm:$0xff]
        %v994 = vld [vmem:[#allocation16 + $0x1b8] sm:$0xff]
        %v995 = vld [vmem:[#allocation16 + $0x1c0] sm:$0xff]
        %v996 = vld [vmem:[#allocation16 + $0x1c8] sm:$0xff]
        %v997 = vld [vmem:[#allocation16 + $0x1d0] sm:$0xff]
        %v998 = vld [vmem:[#allocation16 + $0x1d8] sm:$0xff]
        %v999 = vld [vmem:[#allocation16 + $0x1e0] sm:$0xff]
        %v1000 = vld [vmem:[#allocation16 + $0x1e8] sm:$0xff]
        %v1001 = vld [vmem:[#allocation16 + $0x1f0] sm:$0xff]
        %v1002 = vld [vmem:[#allocation16 + $0x1f8] sm:$0xff]
        %v1003 = vld [vmem:[%s9] sm:$0x3]
        %v1005 = vlaneseq
        %v1006 = vshrl.u32 %v1005, 7
        %v1007 = vsub.s32 0, %v1006
        %v1008 = vrot.slane %v1003, %v1007
        %v1009 = vlaneseq
        %v1010 = vshrl.u32 %v1009, 7
        %v1011 = vsub.s32 1, %v1010
        %v1012 = vrot.slane %v1003, %v1011
        %1015 = vmatprep.subr.mxu0 %v940
        %1016 = vmatpush1.msra.mxu0 %v939
        %1017 = vmatprep.subr.mxu0 %v942
        %1018 = vmatpush1.msra.mxu0 %v941
        %1019 = vmatprep.subr.mxu0 %v944
        %1020 = vmatpush1.msra.mxu0 %v943
        %1021 = vmatprep.subr.mxu0 %v946
        %1022 = vmatpush1.msra.mxu0 %v945
        %1023 = vmatprep.subr.mxu0 %v948
        %1024 = vmatpush1.msra.mxu0 %v947
        %1025 = vmatprep.subr.mxu0 %v950
        %1026 = vmatpush1.msra.mxu0 %v949
        %1027 = vmatprep.subr.mxu0 %v952
        %1028 = vmatpush1.msra.mxu0 %v951
        %1029 = vmatprep.subr.mxu0 %v954
        %1030 = vmatpush1.msra.mxu0 %v953
        %1031 = vmatprep.subr.mxu0 %v956
        %1032 = vmatpush1.msra.mxu0 %v955
        %1033 = vmatprep.subr.mxu0 %v958
        %1034 = vmatpush1.msra.mxu0 %v957
        %1035 = vmatprep.subr.mxu0 %v960
        %1036 = vmatpush1.msra.mxu0 %v959
        %1037 = vmatprep.subr.mxu0 %v962
        %1038 = vmatpush1.msra.mxu0 %v961
        %1039 = vmatprep.subr.mxu0 %v964
        %1040 = vmatpush1.msra.mxu0 %v963
        %1041 = vmatprep.subr.mxu0 %v966
        %1042 = vmatpush1.msra.mxu0 %v965
        %1043 = vmatprep.subr.mxu0 %v968
        %1044 = vmatpush1.msra.mxu0 %v967
        %1045 = vmatprep.subr.mxu0 %v970
        %1046 = vmatpush1.msra.mxu0 %v969
        %1047 = vmatprep.subr.mxu0 %v972
        %1048 = vmatpush1.msra.mxu0 %v971
        %1049 = vmatprep.subr.mxu0 %v974
        %1050 = vmatpush1.msra.mxu0 %v973
        %1051 = vmatprep.subr.mxu0 %v976
        %1052 = vmatpush1.msra.mxu0 %v975
        %1053 = vmatprep.subr.mxu0 %v978
        %1054 = vmatpush1.msra.mxu0 %v977
        %1055 = vmatprep.subr.mxu0 %v980
        %1056 = vmatpush1.msra.mxu0 %v979
        %1057 = vmatprep.subr.mxu0 %v982
        %1058 = vmatpush1.msra.mxu0 %v981
        %1059 = vmatprep.subr.mxu0 %v984
        %1060 = vmatpush1.msra.mxu0 %v983
        %1061 = vmatprep.subr.mxu0 %v986
        %1062 = vmatpush1.msra.mxu0 %v985
        %1063 = vmatprep.subr.mxu0 %v988
        %1064 = vmatpush1.msra.mxu0 %v987
        %1065 = vmatprep.subr.mxu0 %v990
        %1066 = vmatpush1.msra.mxu0 %v989
        %1067 = vmatprep.subr.mxu0 %v992
        %1068 = vmatpush1.msra.mxu0 %v991
        %1069 = vmatprep.subr.mxu0 %v994
        %1070 = vmatpush1.msra.mxu0 %v993
        %1071 = vmatprep.subr.mxu0 %v996
        %1072 = vmatpush1.msra.mxu0 %v995
        %1073 = vmatprep.subr.mxu0 %v998
        %1074 = vmatpush1.msra.mxu0 %v997
        %1075 = vmatprep.subr.mxu0 %v1000
        %1076 = vmatpush1.msra.mxu0 %v999
        %1077 = vmatprep.subr.mxu0 %v1002
        %1078 = vmatpush1.msra.mxu0 %v1001
        %1079 = vmatprep.mubr.f32.mxu0 %v787
        %1080 = vmatmul.mubr.f32.gmra.mrb[0].mxu0 %v786
        %v1081 = vpop.f32.mrb[0].mxu0
        %v1082 = vadd.f32 %v1008, %v1081
        %v1083 = vpop.f32.mrb[0].mxu0
        %v1084 = vadd.f32 %v1012, %v1083
        %1085 = vmatprep.mubr.f32.mxu0 %v789
        %1086 = vmatmul.mubr.f32.gmra.mrb[0].mxu0 %v788
        %v1087 = vpop.f32.mrb[0].mxu0
        %v1088 = vadd.f32 %v1008, %v1087
        %v1089 = vpop.f32.mrb[0].mxu0
        %v1090 = vadd.f32 %v1012, %v1089
        %1091 = vmatprep.mubr.f32.mxu0 %v791
        %1092 = vmatmul.mubr.f32.gmra.mrb[0].mxu0 %v790
        %v1093 = vpop.f32.mrb[0].mxu0
        %v1094 = vadd.f32 %v1008, %v1093
        %v1095 = vpop.f32.mrb[0].mxu0
        %v1096 = vadd.f32 %v1012, %v1095
        %1097 = vdwg.mxu0
        %v1098 = vld [vmem:[#allocation18] sm:$0xff]
        %v1099 = vld [vmem:[#allocation18 + $0x8] sm:$0xff]
        %v1100 = vld [vmem:[#allocation18 + $0x10] sm:$0xff]
        %v1101 = vld [vmem:[#allocation18 + $0x18] sm:$0xff]
        %v1102 = vld [vmem:[#allocation18 + $0x20] sm:$0xff]
        %v1103 = vld [vmem:[#allocation18 + $0x28] sm:$0xff]
        %v1104 = vld [vmem:[#allocation18 + $0x30] sm:$0xff]
        %v1105 = vld [vmem:[#allocation18 + $0x38] sm:$0xff]
        %v1106 = vld [vmem:[#allocation18 + $0x40] sm:$0xff]
        %v1107 = vld [vmem:[#allocation18 + $0x48] sm:$0xff]
        %v1108 = vld [vmem:[#allocation18 + $0x50] sm:$0xff]
        %v1109 = vld [vmem:[#allocation18 + $0x58] sm:$0xff]
        %v1110 = vld [vmem:[#allocation18 + $0x60] sm:$0xff]
        %v1111 = vld [vmem:[#allocation18 + $0x68] sm:$0xff]
        %v1112 = vld [vmem:[#allocation18 + $0x70] sm:$0xff]
        %v1113 = vld [vmem:[#allocation18 + $0x78] sm:$0xff]
        %v1114 = vld [vmem:[#allocation18 + $0x80] sm:$0xff]
        %v1115 = vld [vmem:[#allocation18 + $0x88] sm:$0xff]
        %v1116 = vld [vmem:[#allocation18 + $0x90] sm:$0xff]
        %v1117 = vld [vmem:[#allocation18 + $0x98] sm:$0xff]
        %v1118 = vld [vmem:[#allocation18 + $0xa0] sm:$0xff]
        %v1119 = vld [vmem:[#allocation18 + $0xa8] sm:$0xff]
        %v1120 = vld [vmem:[#allocation18 + $0xb0] sm:$0xff]
        %v1121 = vld [vmem:[#allocation18 + $0xb8] sm:$0xff]
        %v1122 = vld [vmem:[#allocation18 + $0xc0] sm:$0xff]
        %v1123 = vld [vmem:[#allocation18 + $0xc8] sm:$0xff]
        %v1124 = vld [vmem:[#allocation18 + $0xd0] sm:$0xff]
        %v1125 = vld [vmem:[#allocation18 + $0xd8] sm:$0xff]
        %v1126 = vld [vmem:[#allocation18 + $0xe0] sm:$0xff]
        %v1127 = vld [vmem:[#allocation18 + $0xe8] sm:$0xff]
        %v1128 = vld [vmem:[#allocation18 + $0xf0] sm:$0xff]
        %v1129 = vld [vmem:[#allocation18 + $0xf8] sm:$0xff]
        %v1130 = vld [vmem:[#allocation18 + $0x100] sm:$0xff]
        %v1131 = vld [vmem:[#allocation18 + $0x108] sm:$0xff]
        %v1132 = vld [vmem:[#allocation18 + $0x110] sm:$0xff]
        %v1133 = vld [vmem:[#allocation18 + $0x118] sm:$0xff]
        %v1134 = vld [vmem:[#allocation18 + $0x120] sm:$0xff]
        %v1135 = vld [vmem:[#allocation18 + $0x128] sm:$0xff]
        %v1136 = vld [vmem:[#allocation18 + $0x130] sm:$0xff]
        %v1137 = vld [vmem:[#allocation18 + $0x138] sm:$0xff]
        %v1138 = vld [vmem:[#allocation18 + $0x140] sm:$0xff]
        %v1139 = vld [vmem:[#allocation18 + $0x148] sm:$0xff]
        %v1140 = vld [vmem:[#allocation18 + $0x150] sm:$0xff]
        %v1141 = vld [vmem:[#allocation18 + $0x158] sm:$0xff]
        %v1142 = vld [vmem:[#allocation18 + $0x160] sm:$0xff]
        %v1143 = vld [vmem:[#allocation18 + $0x168] sm:$0xff]
        %v1144 = vld [vmem:[#allocation18 + $0x170] sm:$0xff]
        %v1145 = vld [vmem:[#allocation18 + $0x178] sm:$0xff]
        %v1146 = vld [vmem:[#allocation18 + $0x180] sm:$0xff]
        %v1147 = vld [vmem:[#allocation18 + $0x188] sm:$0xff]
        %v1148 = vld [vmem:[#allocation18 + $0x190] sm:$0xff]
        %v1149 = vld [vmem:[#allocation18 + $0x198] sm:$0xff]
        %v1150 = vld [vmem:[#allocation18 + $0x1a0] sm:$0xff]
        %v1151 = vld [vmem:[#allocation18 + $0x1a8] sm:$0xff]
        %v1152 = vld [vmem:[#allocation18 + $0x1b0] sm:$0xff]
        %v1153 = vld [vmem:[#allocation18 + $0x1b8] sm:$0xff]
        %v1154 = vld [vmem:[#allocation18 + $0x1c0] sm:$0xff]
        %v1155 = vld [vmem:[#allocation18 + $0x1c8] sm:$0xff]
        %v1156 = vld [vmem:[#allocation18 + $0x1d0] sm:$0xff]
        %v1157 = vld [vmem:[#allocation18 + $0x1d8] sm:$0xff]
        %v1158 = vld [vmem:[#allocation18 + $0x1e0] sm:$0xff]
        %v1159 = vld [vmem:[#allocation18 + $0x1e8] sm:$0xff]
        %v1160 = vld [vmem:[#allocation18 + $0x1f0] sm:$0xff]
        %v1161 = vld [vmem:[#allocation18 + $0x1f8] sm:$0xff]
        %v1162 = vld [vmem:[%s10] sm:$0x3]
        %v1164 = vlaneseq
        %v1165 = vshrl.u32 %v1164, 7
        %v1166 = vsub.s32 0, %v1165
        %v1167 = vrot.slane %v1162, %v1166
        %v1168 = vlaneseq
        %v1169 = vshrl.u32 %v1168, 7
        %v1170 = vsub.s32 1, %v1169
        %v1171 = vrot.slane %v1162, %v1170
        %1174 = vmatprep.subr.mxu0 %v1099
        %1175 = vmatpush1.msra.mxu0 %v1098
        %1176 = vmatprep.subr.mxu0 %v1101
        %1177 = vmatpush1.msra.mxu0 %v1100
        %1178 = vmatprep.subr.mxu0 %v1103
        %1179 = vmatpush1.msra.mxu0 %v1102
        %1180 = vmatprep.subr.mxu0 %v1105
        %1181 = vmatpush1.msra.mxu0 %v1104
        %1182 = vmatprep.subr.mxu0 %v1107
        %1183 = vmatpush1.msra.mxu0 %v1106
        %1184 = vmatprep.subr.mxu0 %v1109
        %1185 = vmatpush1.msra.mxu0 %v1108
        %1186 = vmatprep.subr.mxu0 %v1111
        %1187 = vmatpush1.msra.mxu0 %v1110
        %1188 = vmatprep.subr.mxu0 %v1113
        %1189 = vmatpush1.msra.mxu0 %v1112
        %1190 = vmatprep.subr.mxu0 %v1115
        %1191 = vmatpush1.msra.mxu0 %v1114
        %1192 = vmatprep.subr.mxu0 %v1117
        %1193 = vmatpush1.msra.mxu0 %v1116
        %1194 = vmatprep.subr.mxu0 %v1119
        %1195 = vmatpush1.msra.mxu0 %v1118
        %1196 = vmatprep.subr.mxu0 %v1121
        %1197 = vmatpush1.msra.mxu0 %v1120
        %1198 = vmatprep.subr.mxu0 %v1123
        %1199 = vmatpush1.msra.mxu0 %v1122
        %1200 = vmatprep.subr.mxu0 %v1125
        %1201 = vmatpush1.msra.mxu0 %v1124
        %1202 = vmatprep.subr.mxu0 %v1127
        %1203 = vmatpush1.msra.mxu0 %v1126
        %1204 = vmatprep.subr.mxu0 %v1129
        %1205 = vmatpush1.msra.mxu0 %v1128
        %1206 = vmatprep.subr.mxu0 %v1131
        %1207 = vmatpush1.msra.mxu0 %v1130
        %1208 = vmatprep.subr.mxu0 %v1133
        %1209 = vmatpush1.msra.mxu0 %v1132
        %1210 = vmatprep.subr.mxu0 %v1135
        %1211 = vmatpush1.msra.mxu0 %v1134
        %1212 = vmatprep.subr.mxu0 %v1137
        %1213 = vmatpush1.msra.mxu0 %v1136
        %1214 = vmatprep.subr.mxu0 %v1139
        %1215 = vmatpush1.msra.mxu0 %v1138
        %1216 = vmatprep.subr.mxu0 %v1141
        %1217 = vmatpush1.msra.mxu0 %v1140
        %1218 = vmatprep.subr.mxu0 %v1143
        %1219 = vmatpush1.msra.mxu0 %v1142
        %1220 = vmatprep.subr.mxu0 %v1145
        %1221 = vmatpush1.msra.mxu0 %v1144
        %1222 = vmatprep.subr.mxu0 %v1147
        %1223 = vmatpush1.msra.mxu0 %v1146
        %1224 = vmatprep.subr.mxu0 %v1149
        %1225 = vmatpush1.msra.mxu0 %v1148
        %1226 = vmatprep.subr.mxu0 %v1151
        %1227 = vmatpush1.msra.mxu0 %v1150
        %1228 = vmatprep.subr.mxu0 %v1153
        %1229 = vmatpush1.msra.mxu0 %v1152
        %1230 = vmatprep.subr.mxu0 %v1155
        %1231 = vmatpush1.msra.mxu0 %v1154
        %1232 = vmatprep.subr.mxu0 %v1157
        %1233 = vmatpush1.msra.mxu0 %v1156
        %1234 = vmatprep.subr.mxu0 %v1159
        %1235 = vmatpush1.msra.mxu0 %v1158
        %1236 = vmatprep.subr.mxu0 %v1161
        %1237 = vmatpush1.msra.mxu0 %v1160
        %1238 = vmatprep.mubr.f32.mxu0 %v787
        %1239 = vmatmul.mubr.f32.gmra.mrb[0].mxu0 %v786
        %v1240 = vpop.f32.mrb[0].mxu0
        %v1241 = vadd.f32 %v1167, %v1240
        %v1242 = vpop.f32.mrb[0].mxu0
        %v1243 = vadd.f32 %v1171, %v1242
        %1244 = vmatprep.mubr.f32.mxu0 %v789
        %1245 = vmatmul.mubr.f32.gmra.mrb[0].mxu0 %v788
        %v1246 = vpop.f32.mrb[0].mxu0
        %v1247 = vadd.f32 %v1167, %v1246
        %v1248 = vpop.f32.mrb[0].mxu0
        %v1249 = vadd.f32 %v1171, %v1248
        %1250 = vmatprep.mubr.f32.mxu0 %v791
        %1251 = vmatmul.mubr.f32.gmra.mrb[0].mxu0 %v790
        %v1252 = vpop.f32.mrb[0].mxu0
        %v1253 = vadd.f32 %v1167, %v1252
        %v1254 = vpop.f32.mrb[0].mxu0
        %v1255 = vadd.f32 %v1171, %v1254
        %1256 = vdwg.mxu0
        %1257 = vst [vmem:[#allocation3] sm:$0xff] %v935
        %1258 = vst [vmem:[#allocation3 + $0x8] sm:$0xff] %v937
        %1259 = vst [vmem:[#allocation4] sm:$0xff] %v1082
        %1260 = vst [vmem:[#allocation4 + $0x8] sm:$0xff] %v1084
        %1261 = vst [vmem:[#allocation4 + $0x10] sm:$0xff] %v1088
        %1262 = vst [vmem:[#allocation4 + $0x18] sm:$0xff] %v1090
        %1263 = vst [vmem:[#allocation4 + $0x20] sm:$0xff] %v1094
        %1264 = vst [vmem:[#allocation4 + $0x28] sm:$0xff] %v1096
        %1265 = vst [vmem:[#allocation5] sm:$0xff] %v1241
        %1266 = vst [vmem:[#allocation5 + $0x8] sm:$0xff] %v1243
        %1267 = vst [vmem:[#allocation5 + $0x10] sm:$0xff] %v1247
        %1268 = vst [vmem:[#allocation5 + $0x18] sm:$0xff] %v1249
        %1269 = vst [vmem:[#allocation5 + $0x20] sm:$0xff] %v1253
        %1270 = vst [vmem:[#allocation5 + $0x28] sm:$0xff] %v1255
        %v1271 = vld [vmem:[#allocation3] sm:$0xff]
        %v1272 = vld [vmem:[#allocation4] sm:$0xff]
        %v1273 = vld [vmem:[#allocation4 + $0x10] sm:$0xff]
        %v1274 = vld [vmem:[#allocation4 + $0x20] sm:$0xff]
        %v1275 = vld [vmem:[#allocation5] sm:$0xff]
        %v1276 = vld [vmem:[#allocation5 + $0x10] sm:$0xff]
        %v1277 = vld [vmem:[#allocation5 + $0x20] sm:$0xff]
        %1278 = vmatprep.subr.mxu0 0.0
        %1279 = vmatpush1.xpose.msra.mxu0 %v1272
        %1280 = vmatprep.subr.mxu0 0.0
        %1281 = vmatpush1.xpose.msra.mxu0 %v1273
        %1282 = vmatprep.subr.mxu0 0.0
        %1283 = vmatpush1.xpose.msra.mxu0 %v1274
        %1284 = vmatprep.subr.mxu0 0.0
        %1285 = vmatpush1.xpose.msra.mxu0 0.0
        %1286 = vmatprep.subr.mxu0 0.0
        %1287 = vmatpush1.xpose.msra.mxu0 0.0
        %1288 = vmatprep.subr.mxu0 0.0
        %1289 = vmatpush1.xpose.msra.mxu0 0.0
        %1290 = vmatprep.subr.mxu0 0.0
        %1291 = vmatpush1.xpose.msra.mxu0 0.0
        %1292 = vmatprep.subr.mxu0 0.0
        %1293 = vmatpush1.xpose.msra.mxu0 0.0
        %1294 = vmatprep.subr.mxu0 0.0
        %1295 = vmatpush1.xpose.msra.mxu0 0.0
        %1296 = vmatprep.subr.mxu0 0.0
        %1297 = vmatpush1.xpose.msra.mxu0 0.0
        %1298 = vmatprep.subr.mxu0 0.0
        %1299 = vmatpush1.xpose.msra.mxu0 0.0
        %1300 = vmatprep.subr.mxu0 0.0
        %1301 = vmatpush1.xpose.msra.mxu0 0.0
        %1302 = vmatprep.subr.mxu0 0.0
        %1303 = vmatpush1.xpose.msra.mxu0 0.0
        %1304 = vmatprep.subr.mxu0 0.0
        %1305 = vmatpush1.xpose.msra.mxu0 0.0
        %1306 = vmatprep.subr.mxu0 0.0
        %1307 = vmatpush1.xpose.msra.mxu0 0.0
        %1308 = vmatprep.subr.mxu0 0.0
        %1309 = vmatpush1.xpose.msra.mxu0 0.0
        %1310 = vmatprep.subr.mxu0 0.0
        %1311 = vmatpush1.xpose.msra.mxu0 0.0
        %1312 = vmatprep.subr.mxu0 0.0
        %1313 = vmatpush1.xpose.msra.mxu0 0.0
        %1314 = vmatprep.subr.mxu0 0.0
        %1315 = vmatpush1.xpose.msra.mxu0 0.0
        %1316 = vmatprep.subr.mxu0 0.0
        %1317 = vmatpush1.xpose.msra.mxu0 0.0
        %1318 = vmatprep.subr.mxu0 0.0
        %1319 = vmatpush1.xpose.msra.mxu0 0.0
        %1320 = vmatprep.subr.mxu0 0.0
        %1321 = vmatpush1.xpose.msra.mxu0 0.0
        %1322 = vmatprep.subr.mxu0 0.0
        %1323 = vmatpush1.xpose.msra.mxu0 0.0
        %1324 = vmatprep.subr.mxu0 0.0
        %1325 = vmatpush1.xpose.msra.mxu0 0.0
        %1326 = vmatprep.subr.mxu0 0.0
        %1327 = vmatpush1.xpose.msra.mxu0 0.0
        %1328 = vmatprep.subr.mxu0 0.0
        %1329 = vmatpush1.xpose.msra.mxu0 0.0
        %1330 = vmatprep.subr.mxu0 0.0
        %1331 = vmatpush1.xpose.msra.mxu0 0.0
        %1332 = vmatprep.subr.mxu0 0.0
        %1333 = vmatpush1.xpose.msra.mxu0 0.0
        %1334 = vmatprep.subr.mxu0 0.0
        %1335 = vmatpush1.xpose.msra.mxu0 0.0
        %1336 = vmatprep.subr.mxu0 0.0
        %1337 = vmatpush1.xpose.msra.mxu0 0.0
        %1338 = vmatprep.subr.mxu0 0.0
        %1339 = vmatpush1.xpose.msra.mxu0 0.0
        %1340 = vmatprep.subr.mxu0 0.0
        %1341 = vmatpush1.xpose.msra.mxu0 0.0
        %1342 = vmatprep.mubr.f32.mxu0 0.0
        %1343 = vmatmul.mubr.f32.gmra.mrb[0].mxu0 %v1271
        %v1344 = vpop.f32.mrb[0].mxu0
        %v1345 = vadd.f32 0.0, %v1344
        %v1346 = vpop.f32.mrb[0].mxu0
        %1347 = vdwg.mxu0
        %v1348 = vmul.f32 %v1345, 0.088388346
        %vm1349 = vcmask 195584
        %v1350 = vsel %vm1349, %v1348, -inf
        %1351 = vmax.xlane.f32.xlu0 %v1350
        %v1352 = vpop.xlane.xlu0 %1351
        %v1353 = vsub.f32 %v1348, %v1352
        %v1354 = vmul.f32 %v1353, 1.442695
        %v1355 = vpow.pop %v1354
        %v1356 = vsel %vm1349, %v1355, 0.0
        %1357 = vadd.xlane.f32.xlu0 %v1356
        %v1358 = vpop.xlane.xlu0 %1357
        %v1360 = vsel %vm1349, %v1355, 0
        %1362 = vmatprep.subr.mxu0 0.0
        %1363 = vmatpush1.msra.mxu0 %v1275
        %1364 = vmatprep.subr.mxu0 0.0
        %1365 = vmatpush1.msra.mxu0 %v1276
        %1366 = vmatprep.subr.mxu0 0.0
        %1367 = vmatpush1.msra.mxu0 %v1277
        %1368 = vmatprep.subr.mxu0 0.0
        %1369 = vmatpush1.msra.mxu0 0.0
        %1370 = vmatprep.subr.mxu0 0.0
        %1371 = vmatpush1.msra.mxu0 0.0
        %1372 = vmatprep.subr.mxu0 0.0
        %1373 = vmatpush1.msra.mxu0 0.0
        %1374 = vmatprep.subr.mxu0 0.0
        %1375 = vmatpush1.msra.mxu0 0.0
        %1376 = vmatprep.subr.mxu0 0.0
        %1377 = vmatpush1.msra.mxu0 0.0
        %1378 = vmatprep.subr.mxu0 0.0
        %1379 = vmatpush1.msra.mxu0 0.0
        %1380 = vmatprep.subr.mxu0 0.0
        %1381 = vmatpush1.msra.mxu0 0.0
        %1382 = vmatprep.subr.mxu0 0.0
        %1383 = vmatpush1.msra.mxu0 0.0
        %1384 = vmatprep.subr.mxu0 0.0
        %1385 = vmatpush1.msra.mxu0 0.0
        %1386 = vmatprep.subr.mxu0 0.0
        %1387 = vmatpush1.msra.mxu0 0.0
        %1388 = vmatprep.subr.mxu0 0.0
        %1389 = vmatpush1.msra.mxu0 0.0
        %1390 = vmatprep.subr.mxu0 0.0
        %1391 = vmatpush1.msra.mxu0 0.0
        %1392 = vmatprep.subr.mxu0 0.0
        %1393 = vmatpush1.msra.mxu0 0.0
        %1394 = vmatprep.subr.mxu0 0.0
        %1395 = vmatpush1.msra.mxu0 0.0
        %1396 = vmatprep.subr.mxu0 0.0
        %1397 = vmatpush1.msra.mxu0 0.0
        %1398 = vmatprep.subr.mxu0 0.0
        %1399 = vmatpush1.msra.mxu0 0.0
        %1400 = vmatprep.subr.mxu0 0.0
        %1401 = vmatpush1.msra.mxu0 0.0
        %1402 = vmatprep.subr.mxu0 0.0
        %1403 = vmatpush1.msra.mxu0 0.0
        %1404 = vmatprep.subr.mxu0 0.0
        %1405 = vmatpush1.msra.mxu0 0.0
        %1406 = vmatprep.subr.mxu0 0.0
        %1407 = vmatpush1.msra.mxu0 0.0
        %1408 = vmatprep.subr.mxu0 0.0
        %1409 = vmatpush1.msra.mxu0 0.0
        %1410 = vmatprep.subr.mxu0 0.0
        %1411 = vmatpush1.msra.mxu0 0.0
        %1412 = vmatprep.subr.mxu0 0.0
        %1413 = vmatpush1.msra.mxu0 0.0
        %1414 = vmatprep.subr.mxu0 0.0
        %1415 = vmatpush1.msra.mxu0 0.0
        %1416 = vmatprep.subr.mxu0 0.0
        %1417 = vmatpush1.msra.mxu0 0.0
        %1418 = vmatprep.subr.mxu0 0.0
        %1419 = vmatpush1.msra.mxu0 0.0
        %1420 = vmatprep.subr.mxu0 0.0
        %1421 = vmatpush1.msra.mxu0 0.0
        %1422 = vmatprep.subr.mxu0 0.0
        %1423 = vmatpush1.msra.mxu0 0.0
        %1424 = vmatprep.subr.mxu0 0.0
        %1425 = vmatpush1.msra.mxu0 0.0
        %1426 = vmatprep.mubr.f32.mxu0 0.0
        %1427 = vmatmul.mubr.f32.gmra.mrb[0].mxu0 %v1360
        %v1428 = vpop.f32.mrb[0].mxu0
        %v1429 = vadd.f32 0.0, %v1428
        %v1430 = vpop.f32.mrb[0].mxu0
        %1431 = vdwg.mxu0
        %v1432 = vrcp.pop %v1358
        %v1433 = vmul.f32 %v1429, %v1432
        %1434 = vst [vmem:[#allocation6] sm:$0xff] %v1433
        %v1435 = vld [vmem:[#allocation3 + $0x8] sm:$0xff]
        %v1436 = vld [vmem:[#allocation4 + $0x8] sm:$0xff]
        %v1437 = vld [vmem:[#allocation4 + $0x18] sm:$0xff]
        %v1438 = vld [vmem:[#allocation4 + $0x28] sm:$0xff]
        %v1439 = vld [vmem:[#allocation5 + $0x8] sm:$0xff]
        %v1440 = vld [vmem:[#allocation5 + $0x18] sm:$0xff]
        %v1441 = vld [vmem:[#allocation5 + $0x28] sm:$0xff]
        %1442 = vmatprep.subr.mxu0 0.0
        %1443 = vmatpush1.xpose.msra.mxu0 %v1436
        %1444 = vmatprep.subr.mxu0 0.0
        %1445 = vmatpush1.xpose.msra.mxu0 %v1437
        %1446 = vmatprep.subr.mxu0 0.0
        %1447 = vmatpush1.xpose.msra.mxu0 %v1438
        %1448 = vmatprep.subr.mxu0 0.0
        %1449 = vmatpush1.xpose.msra.mxu0 0.0
        %1450 = vmatprep.subr.mxu0 0.0
        %1451 = vmatpush1.xpose.msra.mxu0 0.0
        %1452 = vmatprep.subr.mxu0 0.0
        %1453 = vmatpush1.xpose.msra.mxu0 0.0
        %1454 = vmatprep.subr.mxu0 0.0
        %1455 = vmatpush1.xpose.msra.mxu0 0.0
        %1456 = vmatprep.subr.mxu0 0.0
        %1457 = vmatpush1.xpose.msra.mxu0 0.0
        %1458 = vmatprep.subr.mxu0 0.0
        %1459 = vmatpush1.xpose.msra.mxu0 0.0
        %1460 = vmatprep.subr.mxu0 0.0
        %1461 = vmatpush1.xpose.msra.mxu0 0.0
        %1462 = vmatprep.subr.mxu0 0.0
        %1463 = vmatpush1.xpose.msra.mxu0 0.0
        %1464 = vmatprep.subr.mxu0 0.0
        %1465 = vmatpush1.xpose.msra.mxu0 0.0
        %1466 = vmatprep.subr.mxu0 0.0
        %1467 = vmatpush1.xpose.msra.mxu0 0.0
        %1468 = vmatprep.subr.mxu0 0.0
        %1469 = vmatpush1.xpose.msra.mxu0 0.0
        %1470 = vmatprep.subr.mxu0 0.0
        %1471 = vmatpush1.xpose.msra.mxu0 0.0
        %1472 = vmatprep.subr.mxu0 0.0
        %1473 = vmatpush1.xpose.msra.mxu0 0.0
        %1474 = vmatprep.subr.mxu0 0.0
        %1475 = vmatpush1.xpose.msra.mxu0 0.0
        %1476 = vmatprep.subr.mxu0 0.0
        %1477 = vmatpush1.xpose.msra.mxu0 0.0
        %1478 = vmatprep.subr.mxu0 0.0
        %1479 = vmatpush1.xpose.msra.mxu0 0.0
        %1480 = vmatprep.subr.mxu0 0.0
        %1481 = vmatpush1.xpose.msra.mxu0 0.0
        %1482 = vmatprep.subr.mxu0 0.0
        %1483 = vmatpush1.xpose.msra.mxu0 0.0
        %1484 = vmatprep.subr.mxu0 0.0
        %1485 = vmatpush1.xpose.msra.mxu0 0.0
        %1486 = vmatprep.subr.mxu0 0.0
        %1487 = vmatpush1.xpose.msra.mxu0 0.0
        %1488 = vmatprep.subr.mxu0 0.0
        %1489 = vmatpush1.xpose.msra.mxu0 0.0
        %1490 = vmatprep.subr.mxu0 0.0
        %1491 = vmatpush1.xpose.msra.mxu0 0.0
        %1492 = vmatprep.subr.mxu0 0.0
        %1493 = vmatpush1.xpose.msra.mxu0 0.0
        %1494 = vmatprep.subr.mxu0 0.0
        %1495 = vmatpush1.xpose.msra.mxu0 0.0
        %1496 = vmatprep.subr.mxu0 0.0
        %1497 = vmatpush1.xpose.msra.mxu0 0.0
        %1498 = vmatprep.subr.mxu0 0.0
        %1499 = vmatpush1.xpose.msra.mxu0 0.0
        %1500 = vmatprep.subr.mxu0 0.0
        %1501 = vmatpush1.xpose.msra.mxu0 0.0
        %1502 = vmatprep.subr.mxu0 0.0
        %1503 = vmatpush1.xpose.msra.mxu0 0.0
        %1504 = vmatprep.subr.mxu0 0.0
        %1505 = vmatpush1.xpose.msra.mxu0 0.0
        %1506 = vmatprep.mubr.f32.mxu0 0.0
        %1507 = vmatmul.mubr.f32.gmra.mrb[0].mxu0 %v1435
        %v1508 = vpop.f32.mrb[0].mxu0
        %v1509 = vadd.f32 0.0, %v1508
        %v1510 = vpop.f32.mrb[0].mxu0
        %1511 = vdwg.mxu0
        %v1512 = vmul.f32 %v1509, 0.088388346
        %v1513 = vsel %vm1349, %v1512, -inf
        %1514 = vmax.xlane.f32.xlu0 %v1513
        %v1515 = vpop.xlane.xlu0 %1514
        %v1516 = vsub.f32 %v1512, %v1515
        %v1517 = vmul.f32 %v1516, 1.442695
        %v1518 = vpow.pop %v1517
        %v1519 = vsel %vm1349, %v1518, 0.0
        %1520 = vadd.xlane.f32.xlu0 %v1519
        %v1521 = vpop.xlane.xlu0 %1520
        %v1523 = vsel %vm1349, %v1518, 0
        %1525 = vmatprep.subr.mxu0 0.0
        %1526 = vmatpush1.msra.mxu0 %v1439
        %1527 = vmatprep.subr.mxu0 0.0
        %1528 = vmatpush1.msra.mxu0 %v1440
        %1529 = vmatprep.subr.mxu0 0.0
        %1530 = vmatpush1.msra.mxu0 %v1441
        %1531 = vmatprep.subr.mxu0 0.0
        %1532 = vmatpush1.msra.mxu0 0.0
        %1533 = vmatprep.subr.mxu0 0.0
        %1534 = vmatpush1.msra.mxu0 0.0
        %1535 = vmatprep.subr.mxu0 0.0
        %1536 = vmatpush1.msra.mxu0 0.0
        %1537 = vmatprep.subr.mxu0 0.0
        %1538 = vmatpush1.msra.mxu0 0.0
        %1539 = vmatprep.subr.mxu0 0.0
        %1540 = vmatpush1.msra.mxu0 0.0
        %1541 = vmatprep.subr.mxu0 0.0
        %1542 = vmatpush1.msra.mxu0 0.0
        %1543 = vmatprep.subr.mxu0 0.0
        %1544 = vmatpush1.msra.mxu0 0.0
        %1545 = vmatprep.subr.mxu0 0.0
        %1546 = vmatpush1.msra.mxu0 0.0
        %1547 = vmatprep.subr.mxu0 0.0
        %1548 = vmatpush1.msra.mxu0 0.0
        %1549 = vmatprep.subr.mxu0 0.0
        %1550 = vmatpush1.msra.mxu0 0.0
        %1551 = vmatprep.subr.mxu0 0.0
        %1552 = vmatpush1.msra.mxu0 0.0
        %1553 = vmatprep.subr.mxu0 0.0
        %1554 = vmatpush1.msra.mxu0 0.0
        %1555 = vmatprep.subr.mxu0 0.0
        %1556 = vmatpush1.msra.mxu0 0.0
        %1557 = vmatprep.subr.mxu0 0.0
        %1558 = vmatpush1.msra.mxu0 0.0
        %1559 = vmatprep.subr.mxu0 0.0
        %1560 = vmatpush1.msra.mxu0 0.0
        %1561 = vmatprep.subr.mxu0 0.0
        %1562 = vmatpush1.msra.mxu0 0.0
        %1563 = vmatprep.subr.mxu0 0.0
        %1564 = vmatpush1.msra.mxu0 0.0
        %1565 = vmatprep.subr.mxu0 0.0
        %1566 = vmatpush1.msra.mxu0 0.0
        %1567 = vmatprep.subr.mxu0 0.0
        %1568 = vmatpush1.msra.mxu0 0.0
        %1569 = vmatprep.subr.mxu0 0.0
        %1570 = vmatpush1.msra.mxu0 0.0
        %1571 = vmatprep.subr.mxu0 0.0
        %1572 = vmatpush1.msra.mxu0 0.0
        %1573 = vmatprep.subr.mxu0 0.0
        %1574 = vmatpush1.msra.mxu0 0.0
        %1575 = vmatprep.subr.mxu0 0.0
        %1576 = vmatpush1.msra.mxu0 0.0
        %1577 = vmatprep.subr.mxu0 0.0
        %1578 = vmatpush1.msra.mxu0 0.0
        %1579 = vmatprep.subr.mxu0 0.0
        %1580 = vmatpush1.msra.mxu0 0.0
        %1581 = vmatprep.subr.mxu0 0.0
        %1582 = vmatpush1.msra.mxu0 0.0
        %1583 = vmatprep.subr.mxu0 0.0
        %1584 = vmatpush1.msra.mxu0 0.0
        %1585 = vmatprep.subr.mxu0 0.0
        %1586 = vmatpush1.msra.mxu0 0.0
        %1587 = vmatprep.subr.mxu0 0.0
        %1588 = vmatpush1.msra.mxu0 0.0
        %1589 = vmatprep.mubr.f32.mxu0 0.0
        %1590 = vmatmul.mubr.f32.gmra.mrb[0].mxu0 %v1523
        %v1591 = vpop.f32.mrb[0].mxu0
        %v1592 = vadd.f32 0.0, %v1591
        %v1593 = vpop.f32.mrb[0].mxu0
        %1594 = vdwg.mxu0
        %v1595 = vrcp.pop %v1521
        %v1596 = vmul.f32 %v1592, %v1595
        %1597 = vst [vmem:[#allocation6 + $0x8] sm:$0xff] %v1596
        %v1598 = vld [vmem:[#allocation6] sm:$0xff]
        %v1599 = vld [vmem:[#allocation6 + $0x8] sm:$0xff]
        %v1600 = vld [vmem:[#allocation19] sm:$0xff]
        %v1601 = vld [vmem:[#allocation19 + $0x8] sm:$0xff]
        %v1602 = vld [vmem:[#allocation19 + $0x10] sm:$0xff]
        %v1603 = vld [vmem:[#allocation19 + $0x18] sm:$0xff]
        %v1604 = vld [vmem:[#allocation19 + $0x20] sm:$0xff]
        %v1605 = vld [vmem:[#allocation19 + $0x28] sm:$0xff]
        %v1606 = vld [vmem:[#allocation19 + $0x30] sm:$0xff]
        %v1607 = vld [vmem:[#allocation19 + $0x38] sm:$0xff]
        %v1608 = vld [vmem:[#allocation19 + $0x40] sm:$0xff]
        %v1609 = vld [vmem:[#allocation19 + $0x48] sm:$0xff]
        %v1610 = vld [vmem:[#allocation19 + $0x50] sm:$0xff]
        %v1611 = vld [vmem:[#allocation19 + $0x58] sm:$0xff]
        %v1612 = vld [vmem:[#allocation19 + $0x60] sm:$0xff]
        %v1613 = vld [vmem:[#allocation19 + $0x68] sm:$0xff]
        %v1614 = vld [vmem:[#allocation19 + $0x70] sm:$0xff]
        %v1615 = vld [vmem:[#allocation19 + $0x78] sm:$0xff]
        %v1616 = vld [vmem:[#allocation19 + $0x80] sm:$0xff]
        %v1617 = vld [vmem:[#allocation19 + $0x88] sm:$0xff]
        %v1618 = vld [vmem:[#allocation19 + $0x90] sm:$0xff]
        %v1619 = vld [vmem:[#allocation19 + $0x98] sm:$0xff]
        %v1620 = vld [vmem:[#allocation19 + $0xa0] sm:$0xff]
        %v1621 = vld [vmem:[#allocation19 + $0xa8] sm:$0xff]
        %v1622 = vld [vmem:[#allocation19 + $0xb0] sm:$0xff]
        %v1623 = vld [vmem:[#allocation19 + $0xb8] sm:$0xff]
        %v1624 = vld [vmem:[#allocation19 + $0xc0] sm:$0xff]
        %v1625 = vld [vmem:[#allocation19 + $0xc8] sm:$0xff]
        %v1626 = vld [vmem:[#allocation19 + $0xd0] sm:$0xff]
        %v1627 = vld [vmem:[#allocation19 + $0xd8] sm:$0xff]
        %v1628 = vld [vmem:[#allocation19 + $0xe0] sm:$0xff]
        %v1629 = vld [vmem:[#allocation19 + $0xe8] sm:$0xff]
        %v1630 = vld [vmem:[#allocation19 + $0xf0] sm:$0xff]
        %v1631 = vld [vmem:[#allocation19 + $0xf8] sm:$0xff]
        %v1632 = vld [vmem:[#allocation19 + $0x100] sm:$0xff]
        %v1633 = vld [vmem:[#allocation19 + $0x108] sm:$0xff]
        %v1634 = vld [vmem:[#allocation19 + $0x110] sm:$0xff]
        %v1635 = vld [vmem:[#allocation19 + $0x118] sm:$0xff]
        %v1636 = vld [vmem:[#allocation19 + $0x120] sm:$0xff]
        %v1637 = vld [vmem:[#allocation19 + $0x128] sm:$0xff]
        %v1638 = vld [vmem:[#allocation19 + $0x130] sm:$0xff]
        %v1639 = vld [vmem:[#allocation19 + $0x138] sm:$0xff]
        %v1640 = vld [vmem:[#allocation19 + $0x140] sm:$0xff]
        %v1641 = vld [vmem:[#allocation19 + $0x148] sm:$0xff]
        %v1642 = vld [vmem:[#allocation19 + $0x150] sm:$0xff]
        %v1643 = vld [vmem:[#allocation19 + $0x158] sm:$0xff]
        %v1644 = vld [vmem:[#allocation19 + $0x160] sm:$0xff]
        %v1645 = vld [vmem:[#allocation19 + $0x168] sm:$0xff]
        %v1646 = vld [vmem:[#allocation19 + $0x170] sm:$0xff]
        %v1647 = vld [vmem:[#allocation19 + $0x178] sm:$0xff]
        %v1648 = vld [vmem:[#allocation19 + $0x180] sm:$0xff]
        %v1649 = vld [vmem:[#allocation19 + $0x188] sm:$0xff]
        %v1650 = vld [vmem:[#allocation19 + $0x190] sm:$0xff]
        %v1651 = vld [vmem:[#allocation19 + $0x198] sm:$0xff]
        %v1652 = vld [vmem:[#allocation19 + $0x1a0] sm:$0xff]
        %v1653 = vld [vmem:[#allocation19 + $0x1a8] sm:$0xff]
        %v1654 = vld [vmem:[#allocation19 + $0x1b0] sm:$0xff]
        %v1655 = vld [vmem:[#allocation19 + $0x1b8] sm:$0xff]
        %v1656 = vld [vmem:[#allocation19 + $0x1c0] sm:$0xff]
        %v1657 = vld [vmem:[#allocation19 + $0x1c8] sm:$0xff]
        %v1658 = vld [vmem:[#allocation19 + $0x1d0] sm:$0xff]
        %v1659 = vld [vmem:[#allocation19 + $0x1d8] sm:$0xff]
        %v1660 = vld [vmem:[#allocation19 + $0x1e0] sm:$0xff]
        %v1661 = vld [vmem:[#allocation19 + $0x1e8] sm:$0xff]
        %v1662 = vld [vmem:[#allocation19 + $0x1f0] sm:$0xff]
        %v1663 = vld [vmem:[#allocation19 + $0x1f8] sm:$0xff]
        %v1664 = vld [vmem:[%s12] sm:$0x3]
        %v1666 = vlaneseq
        %v1667 = vshrl.u32 %v1666, 7
        %v1668 = vsub.s32 0, %v1667
        %v1669 = vrot.slane %v1664, %v1668
        %v1670 = vlaneseq
        %v1671 = vshrl.u32 %v1670, 7
        %v1672 = vsub.s32 1, %v1671
        %v1673 = vrot.slane %v1664, %v1672
        %1676 = vmatprep.subr.mxu0 %v1601
        %1677 = vmatpush1.msra.mxu0 %v1600
        %1678 = vmatprep.subr.mxu0 %v1603
        %1679 = vmatpush1.msra.mxu0 %v1602
        %1680 = vmatprep.subr.mxu0 %v1605
        %1681 = vmatpush1.msra.mxu0 %v1604
        %1682 = vmatprep.subr.mxu0 %v1607
        %1683 = vmatpush1.msra.mxu0 %v1606
        %1684 = vmatprep.subr.mxu0 %v1609
        %1685 = vmatpush1.msra.mxu0 %v1608
        %1686 = vmatprep.subr.mxu0 %v1611
        %1687 = vmatpush1.msra.mxu0 %v1610
        %1688 = vmatprep.subr.mxu0 %v1613
        %1689 = vmatpush1.msra.mxu0 %v1612
        %1690 = vmatprep.subr.mxu0 %v1615
        %1691 = vmatpush1.msra.mxu0 %v1614
        %1692 = vmatprep.subr.mxu0 %v1617
        %1693 = vmatpush1.msra.mxu0 %v1616
        %1694 = vmatprep.subr.mxu0 %v1619
        %1695 = vmatpush1.msra.mxu0 %v1618
        %1696 = vmatprep.subr.mxu0 %v1621
        %1697 = vmatpush1.msra.mxu0 %v1620
        %1698 = vmatprep.subr.mxu0 %v1623
        %1699 = vmatpush1.msra.mxu0 %v1622
        %1700 = vmatprep.subr.mxu0 %v1625
        %1701 = vmatpush1.msra.mxu0 %v1624
        %1702 = vmatprep.subr.mxu0 %v1627
        %1703 = vmatpush1.msra.mxu0 %v1626
        %1704 = vmatprep.subr.mxu0 %v1629
        %1705 = vmatpush1.msra.mxu0 %v1628
        %1706 = vmatprep.subr.mxu0 %v1631
        %1707 = vmatpush1.msra.mxu0 %v1630
        %1708 = vmatprep.subr.mxu0 %v1633
        %1709 = vmatpush1.msra.mxu0 %v1632
        %1710 = vmatprep.subr.mxu0 %v1635
        %1711 = vmatpush1.msra.mxu0 %v1634
        %1712 = vmatprep.subr.mxu0 %v1637
        %1713 = vmatpush1.msra.mxu0 %v1636
        %1714 = vmatprep.subr.mxu0 %v1639
        %1715 = vmatpush1.msra.mxu0 %v1638
        %1716 = vmatprep.subr.mxu0 %v1641
        %1717 = vmatpush1.msra.mxu0 %v1640
        %1718 = vmatprep.subr.mxu0 %v1643
        %1719 = vmatpush1.msra.mxu0 %v1642
        %1720 = vmatprep.subr.mxu0 %v1645
        %1721 = vmatpush1.msra.mxu0 %v1644
        %1722 = vmatprep.subr.mxu0 %v1647
        %1723 = vmatpush1.msra.mxu0 %v1646
        %1724 = vmatprep.subr.mxu0 %v1649
        %1725 = vmatpush1.msra.mxu0 %v1648
        %1726 = vmatprep.subr.mxu0 %v1651
        %1727 = vmatpush1.msra.mxu0 %v1650
        %1728 = vmatprep.subr.mxu0 %v1653
        %1729 = vmatpush1.msra.mxu0 %v1652
        %1730 = vmatprep.subr.mxu0 %v1655
        %1731 = vmatpush1.msra.mxu0 %v1654
        %1732 = vmatprep.subr.mxu0 %v1657
        %1733 = vmatpush1.msra.mxu0 %v1656
        %1734 = vmatprep.subr.mxu0 %v1659
        %1735 = vmatpush1.msra.mxu0 %v1658
        %1736 = vmatprep.subr.mxu0 %v1661
        %1737 = vmatpush1.msra.mxu0 %v1660
        %1738 = vmatprep.subr.mxu0 %v1663
        %1739 = vmatpush1.msra.mxu0 %v1662
        %1740 = vmatprep.mubr.f32.mxu0 %v1599
        %1741 = vmatmul.mubr.f32.gmra.mrb[0].mxu0 %v1598
        %v1742 = vpop.f32.mrb[0].mxu0
        %v1743 = vadd.f32 %v1669, %v1742
        %v1744 = vpop.f32.mrb[0].mxu0
        %v1745 = vadd.f32 %v1673, %v1744
        %1746 = vdwg.mxu0
        %v1747 = vadd.f32 %v1743, %v778
        %v1748 = vadd.f32 %v1745, %v779
        %1749 = vst [vmem:[%s600] sm:$0xff] %v1747
        %1750 = vst [vmem:[%s600 + $0x8] sm:$0xff] %v1748
        %s1751 = sand.u32 %s332, 1
        %s1752 = scalar_lea.sflag [#allocation9], %s1751
        %s1753 = sand.u32 %s332, 1
        %s1754 = smul.addr %s1753, 16
        %s1755 = scalar_lea.vmem [#allocation21], %s1754
        // Predicated region
        $region105: #{tpu_custom_call.1} parent=71 // pred_check
          %p1756 = pneg %p342
        $region106: #{tpu_custom_call.1} parent=71 // pred_check_branch
          %1758 = sbr.rel (%p1756) target = $region108
        $region107: #{tpu_custom_call.1} parent=71 // pred_region
          %s1760 = ssub.s32 256, 256
          %1761 = vsyncadd %s1752, %s1760
          %s1762 = smul.addr %s36, 2
          %s1763 = smul.addr %s1762, 128
          %s1764 = scalar_lea.hbm %s13, %s1763
          %s1766 = sshll.u32 %s1755, 4
          %s1767 = int_to_ptr.vmem [resolvable:$true] %s1766
          %1769 = dma.vmem_to_hbm [thread:$0]  %s1767, 256, %s1764, %s1752
        $region108: #{tpu_custom_call.1} parent=71 // pred_fallthru
          _
      $region72: #{tpu_custom_call.1} parent=5 // pred_fallthru
        _
      %p1770 = scmp.le.s32.totalorder 2, %s31
      // Predicated region
      $region109: #{tpu_custom_call.1} parent=5 // pred_check
        %p1771 = pneg %p1770
      $region110: #{tpu_custom_call.1} parent=5 // pred_check_branch
        %1773 = sbr.rel (%p1771) target = $region112
      $region111: #{tpu_custom_call.1} parent=5 // pred_region
        %s1774 = ssub.s32 %s31, 2
        // Predicated region
        $region113: #{tpu_custom_call.1} parent=111 // pred_check
          %p1775 = pneg %p348
        $region114: #{tpu_custom_call.1} parent=111 // pred_check_branch
          %1777 = sbr.rel (%p1775) target = $region116
        $region115: #{tpu_custom_call.1} parent=111 // pred_region
          %s1778 = sand.u32 %s333, 1
          %s1779 = scalar_lea.sflag [#allocation9], %s1778
          %s1780 = sand.u32 %s333, 1
          %s1781 = smul.addr %s1780, 16
          %s1782 = scalar_lea.vmem [#allocation21], %s1781
          %1783 = dma.done %s1779, 256
        $region116: #{tpu_custom_call.1} parent=111 // pred_fallthru
          _
      $region112: #{tpu_custom_call.1} parent=5 // pred_fallthru
        _
    $region6: #{tpu_custom_call.1} parent=1 // loop_footer
      %s35 = sadd.s32 1, %s31
    $region7: #{tpu_custom_call.1} parent=1 // loop_footer_branch
      %30 = sbr.rel target = $region3
    $region8: #{tpu_custom_call.1} parent=1 // loop_exit
      _
    %1784 = vsyncpa [#allocation8], 1
    %s1785 = scalar_lea.sflag [#allocation8], 1
    %1786 = vsyncpa %s1785, 1
    %1787 = vsyncpa [#allocation11], 1
    %s1788 = scalar_lea.sflag [#allocation11], 1
    %1789 = vsyncpa %s1788, 1
    %1790 = vsyncpa [#allocation14], 1
    %1791 = vsyncpa [#allocation17], 1
    %1792 = vsyncpa [#allocation20], 1
    %1793 = vsyncpa [#allocation9], 1
    %s1794 = scalar_lea.sflag [#allocation9], 1
    %1795 = vsyncpa %s1794, 1

</llo_original>
